<compile_context>
chip_gen: v7x
topology: tpu7x:2x2x1
jax: 0.10.0
libtpu: 0.0.40
codegen_flags: <defaults>
</compile_context>

<pallas_src>
import math

import jax
import jax.numpy as jnp
from jax.experimental import pallas as pl
from jax.experimental.pallas import tpu as pltpu


def mlp_kernel(x_ref,
               w1_ref, b1_ref,
               w2_ref, b2_ref,
               w3_ref, b3_ref,
               w4_ref, b4_ref,
               w5_ref, b5_ref,
               out_ref):
    """Whole 5-layer MLP fused in one kernel; one batch slab per grid step.

    x_ref   : (2, R, 128) f32 in VMEM  -- feature-major, batch on sublanes+lanes
    w*_ref  : flattened (in*out,) f32 in SMEM, index k*out_dim + j == W[k, j]
    b*_ref  : (out,) f32 in SMEM
    out_ref : (R, 128) f32 in VMEM     -- lane-dense output slab
    """
    # Activations are Python lists of dense (R, 128) f32 slabs, one slab per
    # feature. All layer math is scalar-broadcast VPU mul/add; ReLU is a
    # vselect. Scalar weight loads ride the (otherwise idle) scalar slots.
    h = [x_ref[0], x_ref[1]]

    def dense(rows, w_ref, b_ref, in_dim, out_dim, relu=True):
        out_rows = []
        for j in range(out_dim):
            acc = rows[0] * w_ref[j] + b_ref[j]          # w_ref[0*out_dim + j]
            for k in range(1, in_dim):
                acc = acc + rows[k] * w_ref[k * out_dim + j]
            out_rows.append(jnp.maximum(acc, 0.0) if relu else acc)
        return out_rows

    h = dense(h, w1_ref, b1_ref, 2, 5)
    h = dense(h, w2_ref, b2_ref, 5, 5)
    h = dense(h, w3_ref, b3_ref, 5, 5)
    h = dense(h, w4_ref, b4_ref, 5, 5)
    out = dense(h, w5_ref, b5_ref, 5, 1, relu=False)
    out_ref[...] = out[0]


def net_forward(x, params, *, tm=8192):
    """x: (N, 2) float32. params: dict of (W:(in,out), b:(out,)) tensors.

    Returns (N, 1) float32, matching the PyTorch module.
    """
    N, d_in = x.shape
    assert d_in == 2

    # tm = batch elements per grid step. Multiple of 1024 so the per-step slab
    # (tm//128, 128) is (8,128)-tile aligned (dense vregs, unmasked stores).
    tm = max(1024, (tm // 1024) * 1024)
    n_pad = pl.cdiv(N, tm) * tm
    # Prefer >= 2 grid steps when the batch allows it (v7x: 2 TensorCores get
    # one "parallel" step each; on v5e/v6e the grid is just a sequential loop
    # so shrinking the tile here costs essentially nothing).
    while n_pad // tm == 1 and tm > 1024 and N > 1024:
        tm = max(1024, (tm // 2 // 1024) * 1024)
        n_pad = pl.cdiv(N, tm) * tm

    rows_total = n_pad // 128          # total 128-lane rows of batch
    rows_tile = tm // 128              # rows per grid step (multiple of 8)
    grid = (n_pad // tm,)

    # Feature-major, lane-dense input slab: (2, rows_total, 128).
    xt = x.T                                            # (2, N)
    if n_pad != N:
        xt = jnp.pad(xt, ((0, 0), (0, n_pad - N)))      # zero-pad remainder
    x3 = xt.reshape(2, rows_total, 128)

    (w1, b1), (w2, b2), (w3, b3), (w4, b4), (w5, b5) = (
        params["f1"], params["f2"], params["f3"], params["f4"],
        params["predict"],
    )

    # Flattened weights/biases live whole in SMEM; read as scalars in-kernel.
    smem_spec = pl.BlockSpec(memory_space=pltpu.MemorySpace.SMEM)
    flat = lambda w: w.reshape(-1)

    out2d = pl.pallas_call(
        mlp_kernel,
        out_shape=jax.ShapeDtypeStruct((rows_total, 128), jnp.float32),
        grid_spec=pl.GridSpec(
            grid=grid,
            in_specs=[
                # x slab: batch rows tiled along the grid, lane-dense DMA.
                pl.BlockSpec((2, rows_tile, 128), lambda i: (0, i, 0)),
                smem_spec, smem_spec,   # w1, b1
                smem_spec, smem_spec,   # w2, b2
                smem_spec, smem_spec,   # w3, b3
                smem_spec, smem_spec,   # w4, b4
                smem_spec, smem_spec,   # w5, b5
            ],
            out_specs=pl.BlockSpec((rows_tile, 128), lambda i: (i, 0)),
        ),
        compiler_params=pltpu.CompilerParams(
            dimension_semantics=("parallel",)),
    )(x3,
      flat(w1), b1, flat(w2), b2, flat(w3), b3, flat(w4), b4, flat(w5), b5)

    # Back to the PyTorch-facing (N, 1) layout (cheap wrapper-side reshape).
    return out2d.reshape(n_pad)[:N].reshape(N, 1)


def init_params(key):
    """Deterministic init mimicking nn.Linear's U(-1/sqrt(fan_in), +1/sqrt(fan_in)).

    Weights stored transposed as (in, out); biases as (out,).
    """
    dims = [("f1", 2, 5), ("f2", 5, 5), ("f3", 5, 5), ("f4", 5, 5),
            ("predict", 5, 1)]
    params = {}
    for name, fan_in, fan_out in dims:
        key, kw, kb = jax.random.split(key, 3)
        bound = 1.0 / math.sqrt(fan_in)
        w = jax.random.uniform(kw, (fan_in, fan_out), jnp.float32,
                               minval=-bound, maxval=bound)
        b = jax.random.uniform(kb, (fan_out,), jnp.float32,
                               minval=-bound, maxval=bound)
        params[name] = (w, b)
    return params


def net_forward_ref(x, params):
    """Pure-JAX reference for correctness checking."""
    h = x
    for name in ("f1", "f2", "f3", "f4"):
        w, b = params[name]
        h = jnp.maximum(
            jnp.dot(h, w, precision=jax.lax.Precision.HIGHEST) + b, 0.0)
    w, b = params["predict"]
    return jnp.dot(h, w, precision=jax.lax.Precision.HIGHEST) + b


if __name__ == "__main__":
    key = jax.random.PRNGKey(0)
    key, kx = jax.random.split(key)

    N = 1000  # same batch size as the original PyTorch script (not tile-aligned)
    x = jax.random.normal(kx, (N, 2), dtype=jnp.float32)

    params = init_params(key)

    out = net_forward(x, params)
    out = jax.block_until_ready(out)

    ref = net_forward_ref(x, params)
    assert out.shape == (N, 1)
    assert jnp.allclose(out, ref, atol=1e-5, rtol=1e-5), "mismatch vs reference"

    print("KERNEL_OK")
</pallas_src>

<mosaic_0001>
module attributes {stable_mosaic.version = 11 : i64} {
  func.func @mlp_kernel(%arg0: i32, %arg1: memref<2x64x128xf32, #tpu.memory_space<vmem>>, %arg2: memref<10xf32, #tpu.memory_space<smem>>, %arg3: memref<5xf32, #tpu.memory_space<smem>>, %arg4: memref<25xf32, #tpu.memory_space<smem>>, %arg5: memref<5xf32, #tpu.memory_space<smem>>, %arg6: memref<25xf32, #tpu.memory_space<smem>>, %arg7: memref<5xf32, #tpu.memory_space<smem>>, %arg8: memref<25xf32, #tpu.memory_space<smem>>, %arg9: memref<5xf32, #tpu.memory_space<smem>>, %arg10: memref<5xf32, #tpu.memory_space<smem>>, %arg11: memref<1xf32, #tpu.memory_space<smem>>, %arg12: memref<64x128xf32, #tpu.memory_space<vmem>>) attributes {dimension_semantics = [#tpu.dimension_semantics<parallel>], iteration_bounds = array<i64: 1>, scalar_prefetch = 0 : i64, scratch_operands = 0 : i64, tpu.core_type = #tpu.core_type<tc>, window_params = [{transform_indices = @transform_0, window_bounds = array<i64: 2, 64, 128>}, {transform_indices = @transform_1, window_bounds = array<i64: 10>}, {transform_indices = @transform_2, window_bounds = array<i64: 5>}, {transform_indices = @transform_3, window_bounds = array<i64: 25>}, {transform_indices = @transform_4, window_bounds = array<i64: 5>}, {transform_indices = @transform_5, window_bounds = array<i64: 25>}, {transform_indices = @transform_6, window_bounds = array<i64: 5>}, {transform_indices = @transform_7, window_bounds = array<i64: 25>}, {transform_indices = @transform_8, window_bounds = array<i64: 5>}, {transform_indices = @transform_9, window_bounds = array<i64: 5>}, {transform_indices = @transform_10, window_bounds = array<i64: 1>}, {transform_indices = @transform_11, window_bounds = array<i64: 64, 128>}]} {
    %c0 = arith.constant 0 : index
    %c0_0 = arith.constant 0 : index
    %c0_1 = arith.constant 0 : index
    %0 = vector.load %arg1[%c0, %c0_0, %c0_1] : memref<2x64x128xf32, #tpu.memory_space<vmem>>, vector<1x64x128xf32>
    %1 = vector.shape_cast %0 : vector<1x64x128xf32> to vector<64x128xf32>
    %c1 = arith.constant 1 : index
    %c0_2 = arith.constant 0 : index
    %c0_3 = arith.constant 0 : index
    %2 = vector.load %arg1[%c1, %c0_2, %c0_3] : memref<2x64x128xf32, #tpu.memory_space<vmem>>, vector<1x64x128xf32>
    %3 = vector.shape_cast %2 : vector<1x64x128xf32> to vector<64x128xf32>
    %c0_4 = arith.constant 0 : index
    %4 = memref.load %arg2[%c0_4] : memref<10xf32, #tpu.memory_space<smem>>
    %5 = vector.broadcast %4 : f32 to vector<64x128xf32>
    %6 = arith.mulf %1, %5 : vector<64x128xf32>
    %c0_5 = arith.constant 0 : index
    %7 = memref.load %arg3[%c0_5] : memref<5xf32, #tpu.memory_space<smem>>
    %8 = vector.broadcast %7 : f32 to vector<64x128xf32>
    %9 = arith.addf %6, %8 : vector<64x128xf32>
    %c5 = arith.constant 5 : index
    %10 = memref.load %arg2[%c5] : memref<10xf32, #tpu.memory_space<smem>>
    %11 = vector.broadcast %10 : f32 to vector<64x128xf32>
    %12 = arith.mulf %3, %11 : vector<64x128xf32>
    %13 = arith.addf %9, %12 : vector<64x128xf32>
    %cst = arith.constant 0.000000e+00 : f32
    %14 = vector.broadcast %cst : f32 to vector<64x128xf32>
    %15 = arith.maximumf %13, %14 : vector<64x128xf32>
    %c1_6 = arith.constant 1 : index
    %16 = memref.load %arg2[%c1_6] : memref<10xf32, #tpu.memory_space<smem>>
    %17 = vector.broadcast %16 : f32 to vector<64x128xf32>
    %18 = arith.mulf %1, %17 : vector<64x128xf32>
    %c1_7 = arith.constant 1 : index
    %19 = memref.load %arg3[%c1_7] : memref<5xf32, #tpu.memory_space<smem>>
    %20 = vector.broadcast %19 : f32 to vector<64x128xf32>
    %21 = arith.addf %18, %20 : vector<64x128xf32>
    %c6 = arith.constant 6 : index
    %22 = memref.load %arg2[%c6] : memref<10xf32, #tpu.memory_space<smem>>
    %23 = vector.broadcast %22 : f32 to vector<64x128xf32>
    %24 = arith.mulf %3, %23 : vector<64x128xf32>
    %25 = arith.addf %21, %24 : vector<64x128xf32>
    %cst_8 = arith.constant 0.000000e+00 : f32
    %26 = vector.broadcast %cst_8 : f32 to vector<64x128xf32>
    %27 = arith.maximumf %25, %26 : vector<64x128xf32>
    %c2 = arith.constant 2 : index
    %28 = memref.load %arg2[%c2] : memref<10xf32, #tpu.memory_space<smem>>
    %29 = vector.broadcast %28 : f32 to vector<64x128xf32>
    %30 = arith.mulf %1, %29 : vector<64x128xf32>
    %c2_9 = arith.constant 2 : index
    %31 = memref.load %arg3[%c2_9] : memref<5xf32, #tpu.memory_space<smem>>
    %32 = vector.broadcast %31 : f32 to vector<64x128xf32>
    %33 = arith.addf %30, %32 : vector<64x128xf32>
    %c7 = arith.constant 7 : index
    %34 = memref.load %arg2[%c7] : memref<10xf32, #tpu.memory_space<smem>>
    %35 = vector.broadcast %34 : f32 to vector<64x128xf32>
    %36 = arith.mulf %3, %35 : vector<64x128xf32>
    %37 = arith.addf %33, %36 : vector<64x128xf32>
    %cst_10 = arith.constant 0.000000e+00 : f32
    %38 = vector.broadcast %cst_10 : f32 to vector<64x128xf32>
    %39 = arith.maximumf %37, %38 : vector<64x128xf32>
    %c3 = arith.constant 3 : index
    %40 = memref.load %arg2[%c3] : memref<10xf32, #tpu.memory_space<smem>>
    %41 = vector.broadcast %40 : f32 to vector<64x128xf32>
    %42 = arith.mulf %1, %41 : vector<64x128xf32>
    %c3_11 = arith.constant 3 : index
    %43 = memref.load %arg3[%c3_11] : memref<5xf32, #tpu.memory_space<smem>>
    %44 = vector.broadcast %43 : f32 to vector<64x128xf32>
    %45 = arith.addf %42, %44 : vector<64x128xf32>
    %c8 = arith.constant 8 : index
    %46 = memref.load %arg2[%c8] : memref<10xf32, #tpu.memory_space<smem>>
    %47 = vector.broadcast %46 : f32 to vector<64x128xf32>
    %48 = arith.mulf %3, %47 : vector<64x128xf32>
    %49 = arith.addf %45, %48 : vector<64x128xf32>
    %cst_12 = arith.constant 0.000000e+00 : f32
    %50 = vector.broadcast %cst_12 : f32 to vector<64x128xf32>
    %51 = arith.maximumf %49, %50 : vector<64x128xf32>
    %c4 = arith.constant 4 : index
    %52 = memref.load %arg2[%c4] : memref<10xf32, #tpu.memory_space<smem>>
    %53 = vector.broadcast %52 : f32 to vector<64x128xf32>
    %54 = arith.mulf %1, %53 : vector<64x128xf32>
    %c4_13 = arith.constant 4 : index
    %55 = memref.load %arg3[%c4_13] : memref<5xf32, #tpu.memory_space<smem>>
    %56 = vector.broadcast %55 : f32 to vector<64x128xf32>
    %57 = arith.addf %54, %56 : vector<64x128xf32>
    %c9 = arith.constant 9 : index
    %58 = memref.load %arg2[%c9] : memref<10xf32, #tpu.memory_space<smem>>
    %59 = vector.broadcast %58 : f32 to vector<64x128xf32>
    %60 = arith.mulf %3, %59 : vector<64x128xf32>
    %61 = arith.addf %57, %60 : vector<64x128xf32>
    %cst_14 = arith.constant 0.000000e+00 : f32
    %62 = vector.broadcast %cst_14 : f32 to vector<64x128xf32>
    %63 = arith.maximumf %61, %62 : vector<64x128xf32>
    %c0_15 = arith.constant 0 : index
    %64 = memref.load %arg4[%c0_15] : memref<25xf32, #tpu.memory_space<smem>>
    %65 = vector.broadcast %64 : f32 to vector<64x128xf32>
    %66 = arith.mulf %15, %65 : vector<64x128xf32>
    %c0_16 = arith.constant 0 : index
    %67 = memref.load %arg5[%c0_16] : memref<5xf32, #tpu.memory_space<smem>>
    %68 = vector.broadcast %67 : f32 to vector<64x128xf32>
    %69 = arith.addf %66, %68 : vector<64x128xf32>
    %c5_17 = arith.constant 5 : index
    %70 = memref.load %arg4[%c5_17] : memref<25xf32, #tpu.memory_space<smem>>
    %71 = vector.broadcast %70 : f32 to vector<64x128xf32>
    %72 = arith.mulf %27, %71 : vector<64x128xf32>
    %73 = arith.addf %69, %72 : vector<64x128xf32>
    %c10 = arith.constant 10 : index
    %74 = memref.load %arg4[%c10] : memref<25xf32, #tpu.memory_space<smem>>
    %75 = vector.broadcast %74 : f32 to vector<64x128xf32>
    %76 = arith.mulf %39, %75 : vector<64x128xf32>
    %77 = arith.addf %73, %76 : vector<64x128xf32>
    %c15 = arith.constant 15 : index
    %78 = memref.load %arg4[%c15] : memref<25xf32, #tpu.memory_space<smem>>
    %79 = vector.broadcast %78 : f32 to vector<64x128xf32>
    %80 = arith.mulf %51, %79 : vector<64x128xf32>
    %81 = arith.addf %77, %80 : vector<64x128xf32>
    %c20 = arith.constant 20 : index
    %82 = memref.load %arg4[%c20] : memref<25xf32, #tpu.memory_space<smem>>
    %83 = vector.broadcast %82 : f32 to vector<64x128xf32>
    %84 = arith.mulf %63, %83 : vector<64x128xf32>
    %85 = arith.addf %81, %84 : vector<64x128xf32>
    %cst_18 = arith.constant 0.000000e+00 : f32
    %86 = vector.broadcast %cst_18 : f32 to vector<64x128xf32>
    %87 = arith.maximumf %85, %86 : vector<64x128xf32>
    %c1_19 = arith.constant 1 : index
    %88 = memref.load %arg4[%c1_19] : memref<25xf32, #tpu.memory_space<smem>>
    %89 = vector.broadcast %88 : f32 to vector<64x128xf32>
    %90 = arith.mulf %15, %89 : vector<64x128xf32>
    %c1_20 = arith.constant 1 : index
    %91 = memref.load %arg5[%c1_20] : memref<5xf32, #tpu.memory_space<smem>>
    %92 = vector.broadcast %91 : f32 to vector<64x128xf32>
    %93 = arith.addf %90, %92 : vector<64x128xf32>
    %c6_21 = arith.constant 6 : index
    %94 = memref.load %arg4[%c6_21] : memref<25xf32, #tpu.memory_space<smem>>
    %95 = vector.broadcast %94 : f32 to vector<64x128xf32>
    %96 = arith.mulf %27, %95 : vector<64x128xf32>
    %97 = arith.addf %93, %96 : vector<64x128xf32>
    %c11 = arith.constant 11 : index
    %98 = memref.load %arg4[%c11] : memref<25xf32, #tpu.memory_space<smem>>
    %99 = vector.broadcast %98 : f32 to vector<64x128xf32>
    %100 = arith.mulf %39, %99 : vector<64x128xf32>
    %101 = arith.addf %97, %100 : vector<64x128xf32>
    %c16 = arith.constant 16 : index
    %102 = memref.load %arg4[%c16] : memref<25xf32, #tpu.memory_space<smem>>
    %103 = vector.broadcast %102 : f32 to vector<64x128xf32>
    %104 = arith.mulf %51, %103 : vector<64x128xf32>
    %105 = arith.addf %101, %104 : vector<64x128xf32>
    %c21 = arith.constant 21 : index
    %106 = memref.load %arg4[%c21] : memref<25xf32, #tpu.memory_space<smem>>
    %107 = vector.broadcast %106 : f32 to vector<64x128xf32>
    %108 = arith.mulf %63, %107 : vector<64x128xf32>
    %109 = arith.addf %105, %108 : vector<64x128xf32>
    %cst_22 = arith.constant 0.000000e+00 : f32
    %110 = vector.broadcast %cst_22 : f32 to vector<64x128xf32>
    %111 = arith.maximumf %109, %110 : vector<64x128xf32>
    %c2_23 = arith.constant 2 : index
    %112 = memref.load %arg4[%c2_23] : memref<25xf32, #tpu.memory_space<smem>>
    %113 = vector.broadcast %112 : f32 to vector<64x128xf32>
    %114 = arith.mulf %15, %113 : vector<64x128xf32>
    %c2_24 = arith.constant 2 : index
    %115 = memref.load %arg5[%c2_24] : memref<5xf32, #tpu.memory_space<smem>>
    %116 = vector.broadcast %115 : f32 to vector<64x128xf32>
    %117 = arith.addf %114, %116 : vector<64x128xf32>
    %c7_25 = arith.constant 7 : index
    %118 = memref.load %arg4[%c7_25] : memref<25xf32, #tpu.memory_space<smem>>
    %119 = vector.broadcast %118 : f32 to vector<64x128xf32>
    %120 = arith.mulf %27, %119 : vector<64x128xf32>
    %121 = arith.addf %117, %120 : vector<64x128xf32>
    %c12 = arith.constant 12 : index
    %122 = memref.load %arg4[%c12] : memref<25xf32, #tpu.memory_space<smem>>
    %123 = vector.broadcast %122 : f32 to vector<64x128xf32>
    %124 = arith.mulf %39, %123 : vector<64x128xf32>
    %125 = arith.addf %121, %124 : vector<64x128xf32>
    %c17 = arith.constant 17 : index
    %126 = memref.load %arg4[%c17] : memref<25xf32, #tpu.memory_space<smem>>
    %127 = vector.broadcast %126 : f32 to vector<64x128xf32>
    %128 = arith.mulf %51, %127 : vector<64x128xf32>
    %129 = arith.addf %125, %128 : vector<64x128xf32>
    %c22 = arith.constant 22 : index
    %130 = memref.load %arg4[%c22] : memref<25xf32, #tpu.memory_space<smem>>
    %131 = vector.broadcast %130 : f32 to vector<64x128xf32>
    %132 = arith.mulf %63, %131 : vector<64x128xf32>
    %133 = arith.addf %129, %132 : vector<64x128xf32>
    %cst_26 = arith.constant 0.000000e+00 : f32
    %134 = vector.broadcast %cst_26 : f32 to vector<64x128xf32>
    %135 = arith.maximumf %133, %134 : vector<64x128xf32>
    %c3_27 = arith.constant 3 : index
    %136 = memref.load %arg4[%c3_27] : memref<25xf32, #tpu.memory_space<smem>>
    %137 = vector.broadcast %136 : f32 to vector<64x128xf32>
    %138 = arith.mulf %15, %137 : vector<64x128xf32>
    %c3_28 = arith.constant 3 : index
    %139 = memref.load %arg5[%c3_28] : memref<5xf32, #tpu.memory_space<smem>>
    %140 = vector.broadcast %139 : f32 to vector<64x128xf32>
    %141 = arith.addf %138, %140 : vector<64x128xf32>
    %c8_29 = arith.constant 8 : index
    %142 = memref.load %arg4[%c8_29] : memref<25xf32, #tpu.memory_space<smem>>
    %143 = vector.broadcast %142 : f32 to vector<64x128xf32>
    %144 = arith.mulf %27, %143 : vector<64x128xf32>
    %145 = arith.addf %141, %144 : vector<64x128xf32>
    %c13 = arith.constant 13 : index
    %146 = memref.load %arg4[%c13] : memref<25xf32, #tpu.memory_space<smem>>
    %147 = vector.broadcast %146 : f32 to vector<64x128xf32>
    %148 = arith.mulf %39, %147 : vector<64x128xf32>
    %149 = arith.addf %145, %148 : vector<64x128xf32>
    %c18 = arith.constant 18 : index
    %150 = memref.load %arg4[%c18] : memref<25xf32, #tpu.memory_space<smem>>
    %151 = vector.broadcast %150 : f32 to vector<64x128xf32>
    %152 = arith.mulf %51, %151 : vector<64x128xf32>
    %153 = arith.addf %149, %152 : vector<64x128xf32>
    %c23 = arith.constant 23 : index
    %154 = memref.load %arg4[%c23] : memref<25xf32, #tpu.memory_space<smem>>
    %155 = vector.broadcast %154 : f32 to vector<64x128xf32>
    %156 = arith.mulf %63, %155 : vector<64x128xf32>
    %157 = arith.addf %153, %156 : vector<64x128xf32>
    %cst_30 = arith.constant 0.000000e+00 : f32
    %158 = vector.broadcast %cst_30 : f32 to vector<64x128xf32>
    %159 = arith.maximumf %157, %158 : vector<64x128xf32>
    %c4_31 = arith.constant 4 : index
    %160 = memref.load %arg4[%c4_31] : memref<25xf32, #tpu.memory_space<smem>>
    %161 = vector.broadcast %160 : f32 to vector<64x128xf32>
    %162 = arith.mulf %15, %161 : vector<64x128xf32>
    %c4_32 = arith.constant 4 : index
    %163 = memref.load %arg5[%c4_32] : memref<5xf32, #tpu.memory_space<smem>>
    %164 = vector.broadcast %163 : f32 to vector<64x128xf32>
    %165 = arith.addf %162, %164 : vector<64x128xf32>
    %c9_33 = arith.constant 9 : index
    %166 = memref.load %arg4[%c9_33] : memref<25xf32, #tpu.memory_space<smem>>
    %167 = vector.broadcast %166 : f32 to vector<64x128xf32>
    %168 = arith.mulf %27, %167 : vector<64x128xf32>
    %169 = arith.addf %165, %168 : vector<64x128xf32>
    %c14 = arith.constant 14 : index
    %170 = memref.load %arg4[%c14] : memref<25xf32, #tpu.memory_space<smem>>
    %171 = vector.broadcast %170 : f32 to vector<64x128xf32>
    %172 = arith.mulf %39, %171 : vector<64x128xf32>
    %173 = arith.addf %169, %172 : vector<64x128xf32>
    %c19 = arith.constant 19 : index
    %174 = memref.load %arg4[%c19] : memref<25xf32, #tpu.memory_space<smem>>
    %175 = vector.broadcast %174 : f32 to vector<64x128xf32>
    %176 = arith.mulf %51, %175 : vector<64x128xf32>
    %177 = arith.addf %173, %176 : vector<64x128xf32>
    %c24 = arith.constant 24 : index
    %178 = memref.load %arg4[%c24] : memref<25xf32, #tpu.memory_space<smem>>
    %179 = vector.broadcast %178 : f32 to vector<64x128xf32>
    %180 = arith.mulf %63, %179 : vector<64x128xf32>
    %181 = arith.addf %177, %180 : vector<64x128xf32>
    %cst_34 = arith.constant 0.000000e+00 : f32
    %182 = vector.broadcast %cst_34 : f32 to vector<64x128xf32>
    %183 = arith.maximumf %181, %182 : vector<64x128xf32>
    %c0_35 = arith.constant 0 : index
    %184 = memref.load %arg6[%c0_35] : memref<25xf32, #tpu.memory_space<smem>>
    %185 = vector.broadcast %184 : f32 to vector<64x128xf32>
    %186 = arith.mulf %87, %185 : vector<64x128xf32>
    %c0_36 = arith.constant 0 : index
    %187 = memref.load %arg7[%c0_36] : memref<5xf32, #tpu.memory_space<smem>>
    %188 = vector.broadcast %187 : f32 to vector<64x128xf32>
    %189 = arith.addf %186, %188 : vector<64x128xf32>
    %c5_37 = arith.constant 5 : index
    %190 = memref.load %arg6[%c5_37] : memref<25xf32, #tpu.memory_space<smem>>
    %191 = vector.broadcast %190 : f32 to vector<64x128xf32>
    %192 = arith.mulf %111, %191 : vector<64x128xf32>
    %193 = arith.addf %189, %192 : vector<64x128xf32>
    %c10_38 = arith.constant 10 : index
    %194 = memref.load %arg6[%c10_38] : memref<25xf32, #tpu.memory_space<smem>>
    %195 = vector.broadcast %194 : f32 to vector<64x128xf32>
    %196 = arith.mulf %135, %195 : vector<64x128xf32>
    %197 = arith.addf %193, %196 : vector<64x128xf32>
    %c15_39 = arith.constant 15 : index
    %198 = memref.load %arg6[%c15_39] : memref<25xf32, #tpu.memory_space<smem>>
    %199 = vector.broadcast %198 : f32 to vector<64x128xf32>
    %200 = arith.mulf %159, %199 : vector<64x128xf32>
    %201 = arith.addf %197, %200 : vector<64x128xf32>
    %c20_40 = arith.constant 20 : index
    %202 = memref.load %arg6[%c20_40] : memref<25xf32, #tpu.memory_space<smem>>
    %203 = vector.broadcast %202 : f32 to vector<64x128xf32>
    %204 = arith.mulf %183, %203 : vector<64x128xf32>
    %205 = arith.addf %201, %204 : vector<64x128xf32>
    %cst_41 = arith.constant 0.000000e+00 : f32
    %206 = vector.broadcast %cst_41 : f32 to vector<64x128xf32>
    %207 = arith.maximumf %205, %206 : vector<64x128xf32>
    %c1_42 = arith.constant 1 : index
    %208 = memref.load %arg6[%c1_42] : memref<25xf32, #tpu.memory_space<smem>>
    %209 = vector.broadcast %208 : f32 to vector<64x128xf32>
    %210 = arith.mulf %87, %209 : vector<64x128xf32>
    %c1_43 = arith.constant 1 : index
    %211 = memref.load %arg7[%c1_43] : memref<5xf32, #tpu.memory_space<smem>>
    %212 = vector.broadcast %211 : f32 to vector<64x128xf32>
    %213 = arith.addf %210, %212 : vector<64x128xf32>
    %c6_44 = arith.constant 6 : index
    %214 = memref.load %arg6[%c6_44] : memref<25xf32, #tpu.memory_space<smem>>
    %215 = vector.broadcast %214 : f32 to vector<64x128xf32>
    %216 = arith.mulf %111, %215 : vector<64x128xf32>
    %217 = arith.addf %213, %216 : vector<64x128xf32>
    %c11_45 = arith.constant 11 : index
    %218 = memref.load %arg6[%c11_45] : memref<25xf32, #tpu.memory_space<smem>>
    %219 = vector.broadcast %218 : f32 to vector<64x128xf32>
    %220 = arith.mulf %135, %219 : vector<64x128xf32>
    %221 = arith.addf %217, %220 : vector<64x128xf32>
    %c16_46 = arith.constant 16 : index
    %222 = memref.load %arg6[%c16_46] : memref<25xf32, #tpu.memory_space<smem>>
    %223 = vector.broadcast %222 : f32 to vector<64x128xf32>
    %224 = arith.mulf %159, %223 : vector<64x128xf32>
    %225 = arith.addf %221, %224 : vector<64x128xf32>
    %c21_47 = arith.constant 21 : index
    %226 = memref.load %arg6[%c21_47] : memref<25xf32, #tpu.memory_space<smem>>
    %227 = vector.broadcast %226 : f32 to vector<64x128xf32>
    %228 = arith.mulf %183, %227 : vector<64x128xf32>
    %229 = arith.addf %225, %228 : vector<64x128xf32>
    %cst_48 = arith.constant 0.000000e+00 : f32
    %230 = vector.broadcast %cst_48 : f32 to vector<64x128xf32>
    %231 = arith.maximumf %229, %230 : vector<64x128xf32>
    %c2_49 = arith.constant 2 : index
    %232 = memref.load %arg6[%c2_49] : memref<25xf32, #tpu.memory_space<smem>>
    %233 = vector.broadcast %232 : f32 to vector<64x128xf32>
    %234 = arith.mulf %87, %233 : vector<64x128xf32>
    %c2_50 = arith.constant 2 : index
    %235 = memref.load %arg7[%c2_50] : memref<5xf32, #tpu.memory_space<smem>>
    %236 = vector.broadcast %235 : f32 to vector<64x128xf32>
    %237 = arith.addf %234, %236 : vector<64x128xf32>
    %c7_51 = arith.constant 7 : index
    %238 = memref.load %arg6[%c7_51] : memref<25xf32, #tpu.memory_space<smem>>
    %239 = vector.broadcast %238 : f32 to vector<64x128xf32>
    %240 = arith.mulf %111, %239 : vector<64x128xf32>
    %241 = arith.addf %237, %240 : vector<64x128xf32>
    %c12_52 = arith.constant 12 : index
    %242 = memref.load %arg6[%c12_52] : memref<25xf32, #tpu.memory_space<smem>>
    %243 = vector.broadcast %242 : f32 to vector<64x128xf32>
    %244 = arith.mulf %135, %243 : vector<64x128xf32>
    %245 = arith.addf %241, %244 : vector<64x128xf32>
    %c17_53 = arith.constant 17 : index
    %246 = memref.load %arg6[%c17_53] : memref<25xf32, #tpu.memory_space<smem>>
    %247 = vector.broadcast %246 : f32 to vector<64x128xf32>
    %248 = arith.mulf %159, %247 : vector<64x128xf32>
    %249 = arith.addf %245, %248 : vector<64x128xf32>
    %c22_54 = arith.constant 22 : index
    %250 = memref.load %arg6[%c22_54] : memref<25xf32, #tpu.memory_space<smem>>
    %251 = vector.broadcast %250 : f32 to vector<64x128xf32>
    %252 = arith.mulf %183, %251 : vector<64x128xf32>
    %253 = arith.addf %249, %252 : vector<64x128xf32>
    %cst_55 = arith.constant 0.000000e+00 : f32
    %254 = vector.broadcast %cst_55 : f32 to vector<64x128xf32>
    %255 = arith.maximumf %253, %254 : vector<64x128xf32>
    %c3_56 = arith.constant 3 : index
    %256 = memref.load %arg6[%c3_56] : memref<25xf32, #tpu.memory_space<smem>>
    %257 = vector.broadcast %256 : f32 to vector<64x128xf32>
    %258 = arith.mulf %87, %257 : vector<64x128xf32>
    %c3_57 = arith.constant 3 : index
    %259 = memref.load %arg7[%c3_57] : memref<5xf32, #tpu.memory_space<smem>>
    %260 = vector.broadcast %259 : f32 to vector<64x128xf32>
    %261 = arith.addf %258, %260 : vector<64x128xf32>
    %c8_58 = arith.constant 8 : index
    %262 = memref.load %arg6[%c8_58] : memref<25xf32, #tpu.memory_space<smem>>
    %263 = vector.broadcast %262 : f32 to vector<64x128xf32>
    %264 = arith.mulf %111, %263 : vector<64x128xf32>
    %265 = arith.addf %261, %264 : vector<64x128xf32>
    %c13_59 = arith.constant 13 : index
    %266 = memref.load %arg6[%c13_59] : memref<25xf32, #tpu.memory_space<smem>>
    %267 = vector.broadcast %266 : f32 to vector<64x128xf32>
    %268 = arith.mulf %135, %267 : vector<64x128xf32>
    %269 = arith.addf %265, %268 : vector<64x128xf32>
    %c18_60 = arith.constant 18 : index
    %270 = memref.load %arg6[%c18_60] : memref<25xf32, #tpu.memory_space<smem>>
    %271 = vector.broadcast %270 : f32 to vector<64x128xf32>
    %272 = arith.mulf %159, %271 : vector<64x128xf32>
    %273 = arith.addf %269, %272 : vector<64x128xf32>
    %c23_61 = arith.constant 23 : index
    %274 = memref.load %arg6[%c23_61] : memref<25xf32, #tpu.memory_space<smem>>
    %275 = vector.broadcast %274 : f32 to vector<64x128xf32>
    %276 = arith.mulf %183, %275 : vector<64x128xf32>
    %277 = arith.addf %273, %276 : vector<64x128xf32>
    %cst_62 = arith.constant 0.000000e+00 : f32
    %278 = vector.broadcast %cst_62 : f32 to vector<64x128xf32>
    %279 = arith.maximumf %277, %278 : vector<64x128xf32>
    %c4_63 = arith.constant 4 : index
    %280 = memref.load %arg6[%c4_63] : memref<25xf32, #tpu.memory_space<smem>>
    %281 = vector.broadcast %280 : f32 to vector<64x128xf32>
    %282 = arith.mulf %87, %281 : vector<64x128xf32>
    %c4_64 = arith.constant 4 : index
    %283 = memref.load %arg7[%c4_64] : memref<5xf32, #tpu.memory_space<smem>>
    %284 = vector.broadcast %283 : f32 to vector<64x128xf32>
    %285 = arith.addf %282, %284 : vector<64x128xf32>
    %c9_65 = arith.constant 9 : index
    %286 = memref.load %arg6[%c9_65] : memref<25xf32, #tpu.memory_space<smem>>
    %287 = vector.broadcast %286 : f32 to vector<64x128xf32>
    %288 = arith.mulf %111, %287 : vector<64x128xf32>
    %289 = arith.addf %285, %288 : vector<64x128xf32>
    %c14_66 = arith.constant 14 : index
    %290 = memref.load %arg6[%c14_66] : memref<25xf32, #tpu.memory_space<smem>>
    %291 = vector.broadcast %290 : f32 to vector<64x128xf32>
    %292 = arith.mulf %135, %291 : vector<64x128xf32>
    %293 = arith.addf %289, %292 : vector<64x128xf32>
    %c19_67 = arith.constant 19 : index
    %294 = memref.load %arg6[%c19_67] : memref<25xf32, #tpu.memory_space<smem>>
    %295 = vector.broadcast %294 : f32 to vector<64x128xf32>
    %296 = arith.mulf %159, %295 : vector<64x128xf32>
    %297 = arith.addf %293, %296 : vector<64x128xf32>
    %c24_68 = arith.constant 24 : index
    %298 = memref.load %arg6[%c24_68] : memref<25xf32, #tpu.memory_space<smem>>
    %299 = vector.broadcast %298 : f32 to vector<64x128xf32>
    %300 = arith.mulf %183, %299 : vector<64x128xf32>
    %301 = arith.addf %297, %300 : vector<64x128xf32>
    %cst_69 = arith.constant 0.000000e+00 : f32
    %302 = vector.broadcast %cst_69 : f32 to vector<64x128xf32>
    %303 = arith.maximumf %301, %302 : vector<64x128xf32>
    %c0_70 = arith.constant 0 : index
    %304 = memref.load %arg8[%c0_70] : memref<25xf32, #tpu.memory_space<smem>>
    %305 = vector.broadcast %304 : f32 to vector<64x128xf32>
    %306 = arith.mulf %207, %305 : vector<64x128xf32>
    %c0_71 = arith.constant 0 : index
    %307 = memref.load %arg9[%c0_71] : memref<5xf32, #tpu.memory_space<smem>>
    %308 = vector.broadcast %307 : f32 to vector<64x128xf32>
    %309 = arith.addf %306, %308 : vector<64x128xf32>
    %c5_72 = arith.constant 5 : index
    %310 = memref.load %arg8[%c5_72] : memref<25xf32, #tpu.memory_space<smem>>
    %311 = vector.broadcast %310 : f32 to vector<64x128xf32>
    %312 = arith.mulf %231, %311 : vector<64x128xf32>
    %313 = arith.addf %309, %312 : vector<64x128xf32>
    %c10_73 = arith.constant 10 : index
    %314 = memref.load %arg8[%c10_73] : memref<25xf32, #tpu.memory_space<smem>>
    %315 = vector.broadcast %314 : f32 to vector<64x128xf32>
    %316 = arith.mulf %255, %315 : vector<64x128xf32>
    %317 = arith.addf %313, %316 : vector<64x128xf32>
    %c15_74 = arith.constant 15 : index
    %318 = memref.load %arg8[%c15_74] : memref<25xf32, #tpu.memory_space<smem>>
    %319 = vector.broadcast %318 : f32 to vector<64x128xf32>
    %320 = arith.mulf %279, %319 : vector<64x128xf32>
    %321 = arith.addf %317, %320 : vector<64x128xf32>
    %c20_75 = arith.constant 20 : index
    %322 = memref.load %arg8[%c20_75] : memref<25xf32, #tpu.memory_space<smem>>
    %323 = vector.broadcast %322 : f32 to vector<64x128xf32>
    %324 = arith.mulf %303, %323 : vector<64x128xf32>
    %325 = arith.addf %321, %324 : vector<64x128xf32>
    %cst_76 = arith.constant 0.000000e+00 : f32
    %326 = vector.broadcast %cst_76 : f32 to vector<64x128xf32>
    %327 = arith.maximumf %325, %326 : vector<64x128xf32>
    %c1_77 = arith.constant 1 : index
    %328 = memref.load %arg8[%c1_77] : memref<25xf32, #tpu.memory_space<smem>>
    %329 = vector.broadcast %328 : f32 to vector<64x128xf32>
    %330 = arith.mulf %207, %329 : vector<64x128xf32>
    %c1_78 = arith.constant 1 : index
    %331 = memref.load %arg9[%c1_78] : memref<5xf32, #tpu.memory_space<smem>>
    %332 = vector.broadcast %331 : f32 to vector<64x128xf32>
    %333 = arith.addf %330, %332 : vector<64x128xf32>
    %c6_79 = arith.constant 6 : index
    %334 = memref.load %arg8[%c6_79] : memref<25xf32, #tpu.memory_space<smem>>
    %335 = vector.broadcast %334 : f32 to vector<64x128xf32>
    %336 = arith.mulf %231, %335 : vector<64x128xf32>
    %337 = arith.addf %333, %336 : vector<64x128xf32>
    %c11_80 = arith.constant 11 : index
    %338 = memref.load %arg8[%c11_80] : memref<25xf32, #tpu.memory_space<smem>>
    %339 = vector.broadcast %338 : f32 to vector<64x128xf32>
    %340 = arith.mulf %255, %339 : vector<64x128xf32>
    %341 = arith.addf %337, %340 : vector<64x128xf32>
    %c16_81 = arith.constant 16 : index
    %342 = memref.load %arg8[%c16_81] : memref<25xf32, #tpu.memory_space<smem>>
    %343 = vector.broadcast %342 : f32 to vector<64x128xf32>
    %344 = arith.mulf %279, %343 : vector<64x128xf32>
    %345 = arith.addf %341, %344 : vector<64x128xf32>
    %c21_82 = arith.constant 21 : index
    %346 = memref.load %arg8[%c21_82] : memref<25xf32, #tpu.memory_space<smem>>
    %347 = vector.broadcast %346 : f32 to vector<64x128xf32>
    %348 = arith.mulf %303, %347 : vector<64x128xf32>
    %349 = arith.addf %345, %348 : vector<64x128xf32>
    %cst_83 = arith.constant 0.000000e+00 : f32
    %350 = vector.broadcast %cst_83 : f32 to vector<64x128xf32>
    %351 = arith.maximumf %349, %350 : vector<64x128xf32>
    %c2_84 = arith.constant 2 : index
    %352 = memref.load %arg8[%c2_84] : memref<25xf32, #tpu.memory_space<smem>>
    %353 = vector.broadcast %352 : f32 to vector<64x128xf32>
    %354 = arith.mulf %207, %353 : vector<64x128xf32>
    %c2_85 = arith.constant 2 : index
    %355 = memref.load %arg9[%c2_85] : memref<5xf32, #tpu.memory_space<smem>>
    %356 = vector.broadcast %355 : f32 to vector<64x128xf32>
    %357 = arith.addf %354, %356 : vector<64x128xf32>
    %c7_86 = arith.constant 7 : index
    %358 = memref.load %arg8[%c7_86] : memref<25xf32, #tpu.memory_space<smem>>
    %359 = vector.broadcast %358 : f32 to vector<64x128xf32>
    %360 = arith.mulf %231, %359 : vector<64x128xf32>
    %361 = arith.addf %357, %360 : vector<64x128xf32>
    %c12_87 = arith.constant 12 : index
    %362 = memref.load %arg8[%c12_87] : memref<25xf32, #tpu.memory_space<smem>>
    %363 = vector.broadcast %362 : f32 to vector<64x128xf32>
    %364 = arith.mulf %255, %363 : vector<64x128xf32>
    %365 = arith.addf %361, %364 : vector<64x128xf32>
    %c17_88 = arith.constant 17 : index
    %366 = memref.load %arg8[%c17_88] : memref<25xf32, #tpu.memory_space<smem>>
    %367 = vector.broadcast %366 : f32 to vector<64x128xf32>
    %368 = arith.mulf %279, %367 : vector<64x128xf32>
    %369 = arith.addf %365, %368 : vector<64x128xf32>
    %c22_89 = arith.constant 22 : index
    %370 = memref.load %arg8[%c22_89] : memref<25xf32, #tpu.memory_space<smem>>
    %371 = vector.broadcast %370 : f32 to vector<64x128xf32>
    %372 = arith.mulf %303, %371 : vector<64x128xf32>
    %373 = arith.addf %369, %372 : vector<64x128xf32>
    %cst_90 = arith.constant 0.000000e+00 : f32
    %374 = vector.broadcast %cst_90 : f32 to vector<64x128xf32>
    %375 = arith.maximumf %373, %374 : vector<64x128xf32>
    %c3_91 = arith.constant 3 : index
    %376 = memref.load %arg8[%c3_91] : memref<25xf32, #tpu.memory_space<smem>>
    %377 = vector.broadcast %376 : f32 to vector<64x128xf32>
    %378 = arith.mulf %207, %377 : vector<64x128xf32>
    %c3_92 = arith.constant 3 : index
    %379 = memref.load %arg9[%c3_92] : memref<5xf32, #tpu.memory_space<smem>>
    %380 = vector.broadcast %379 : f32 to vector<64x128xf32>
    %381 = arith.addf %378, %380 : vector<64x128xf32>
    %c8_93 = arith.constant 8 : index
    %382 = memref.load %arg8[%c8_93] : memref<25xf32, #tpu.memory_space<smem>>
    %383 = vector.broadcast %382 : f32 to vector<64x128xf32>
    %384 = arith.mulf %231, %383 : vector<64x128xf32>
    %385 = arith.addf %381, %384 : vector<64x128xf32>
    %c13_94 = arith.constant 13 : index
    %386 = memref.load %arg8[%c13_94] : memref<25xf32, #tpu.memory_space<smem>>
    %387 = vector.broadcast %386 : f32 to vector<64x128xf32>
    %388 = arith.mulf %255, %387 : vector<64x128xf32>
    %389 = arith.addf %385, %388 : vector<64x128xf32>
    %c18_95 = arith.constant 18 : index
    %390 = memref.load %arg8[%c18_95] : memref<25xf32, #tpu.memory_space<smem>>
    %391 = vector.broadcast %390 : f32 to vector<64x128xf32>
    %392 = arith.mulf %279, %391 : vector<64x128xf32>
    %393 = arith.addf %389, %392 : vector<64x128xf32>
    %c23_96 = arith.constant 23 : index
    %394 = memref.load %arg8[%c23_96] : memref<25xf32, #tpu.memory_space<smem>>
    %395 = vector.broadcast %394 : f32 to vector<64x128xf32>
    %396 = arith.mulf %303, %395 : vector<64x128xf32>
    %397 = arith.addf %393, %396 : vector<64x128xf32>
    %cst_97 = arith.constant 0.000000e+00 : f32
    %398 = vector.broadcast %cst_97 : f32 to vector<64x128xf32>
    %399 = arith.maximumf %397, %398 : vector<64x128xf32>
    %c4_98 = arith.constant 4 : index
    %400 = memref.load %arg8[%c4_98] : memref<25xf32, #tpu.memory_space<smem>>
    %401 = vector.broadcast %400 : f32 to vector<64x128xf32>
    %402 = arith.mulf %207, %401 : vector<64x128xf32>
    %c4_99 = arith.constant 4 : index
    %403 = memref.load %arg9[%c4_99] : memref<5xf32, #tpu.memory_space<smem>>
    %404 = vector.broadcast %403 : f32 to vector<64x128xf32>
    %405 = arith.addf %402, %404 : vector<64x128xf32>
    %c9_100 = arith.constant 9 : index
    %406 = memref.load %arg8[%c9_100] : memref<25xf32, #tpu.memory_space<smem>>
    %407 = vector.broadcast %406 : f32 to vector<64x128xf32>
    %408 = arith.mulf %231, %407 : vector<64x128xf32>
    %409 = arith.addf %405, %408 : vector<64x128xf32>
    %c14_101 = arith.constant 14 : index
    %410 = memref.load %arg8[%c14_101] : memref<25xf32, #tpu.memory_space<smem>>
    %411 = vector.broadcast %410 : f32 to vector<64x128xf32>
    %412 = arith.mulf %255, %411 : vector<64x128xf32>
    %413 = arith.addf %409, %412 : vector<64x128xf32>
    %c19_102 = arith.constant 19 : index
    %414 = memref.load %arg8[%c19_102] : memref<25xf32, #tpu.memory_space<smem>>
    %415 = vector.broadcast %414 : f32 to vector<64x128xf32>
    %416 = arith.mulf %279, %415 : vector<64x128xf32>
    %417 = arith.addf %413, %416 : vector<64x128xf32>
    %c24_103 = arith.constant 24 : index
    %418 = memref.load %arg8[%c24_103] : memref<25xf32, #tpu.memory_space<smem>>
    %419 = vector.broadcast %418 : f32 to vector<64x128xf32>
    %420 = arith.mulf %303, %419 : vector<64x128xf32>
    %421 = arith.addf %417, %420 : vector<64x128xf32>
    %cst_104 = arith.constant 0.000000e+00 : f32
    %422 = vector.broadcast %cst_104 : f32 to vector<64x128xf32>
    %423 = arith.maximumf %421, %422 : vector<64x128xf32>
    %c0_105 = arith.constant 0 : index
    %424 = memref.load %arg10[%c0_105] : memref<5xf32, #tpu.memory_space<smem>>
    %425 = vector.broadcast %424 : f32 to vector<64x128xf32>
    %426 = arith.mulf %327, %425 : vector<64x128xf32>
    %c0_106 = arith.constant 0 : index
    %427 = memref.load %arg11[%c0_106] : memref<1xf32, #tpu.memory_space<smem>>
    %428 = vector.broadcast %427 : f32 to vector<64x128xf32>
    %429 = arith.addf %426, %428 : vector<64x128xf32>
    %c1_107 = arith.constant 1 : index
    %430 = memref.load %arg10[%c1_107] : memref<5xf32, #tpu.memory_space<smem>>
    %431 = vector.broadcast %430 : f32 to vector<64x128xf32>
    %432 = arith.mulf %351, %431 : vector<64x128xf32>
    %433 = arith.addf %429, %432 : vector<64x128xf32>
    %c2_108 = arith.constant 2 : index
    %434 = memref.load %arg10[%c2_108] : memref<5xf32, #tpu.memory_space<smem>>
    %435 = vector.broadcast %434 : f32 to vector<64x128xf32>
    %436 = arith.mulf %375, %435 : vector<64x128xf32>
    %437 = arith.addf %433, %436 : vector<64x128xf32>
    %c3_109 = arith.constant 3 : index
    %438 = memref.load %arg10[%c3_109] : memref<5xf32, #tpu.memory_space<smem>>
    %439 = vector.broadcast %438 : f32 to vector<64x128xf32>
    %440 = arith.mulf %399, %439 : vector<64x128xf32>
    %441 = arith.addf %437, %440 : vector<64x128xf32>
    %c4_110 = arith.constant 4 : index
    %442 = memref.load %arg10[%c4_110] : memref<5xf32, #tpu.memory_space<smem>>
    %443 = vector.broadcast %442 : f32 to vector<64x128xf32>
    %444 = arith.mulf %423, %443 : vector<64x128xf32>
    %445 = arith.addf %441, %444 : vector<64x128xf32>
    %c0_111 = arith.constant 0 : index
    %c0_112 = arith.constant 0 : index
    %446 = vector.load %arg12[%c0_111, %c0_112] : memref<64x128xf32, #tpu.memory_space<vmem>>, vector<64x128xf32>
    tpu.vector_store %arg12[%c0_111, %c0_112], %445 {strides = array<i32>} : memref<64x128xf32, #tpu.memory_space<vmem>>, vector<64x128xf32>,
    return
  }
  func.func @transform_0(%arg0: i32) -> (i32, i32, i32) {
    %c0_i32 = arith.constant 0 : i32
    %c0_i32_0 = arith.constant 0 : i32
    %c0_i32_1 = arith.constant 0 : i32
    return %c0_i32, %arg0, %c0_i32_0 : i32, i32, i32
  }
  func.func @transform_1(%arg0: i32) -> i32 {
    %c0_i32 = arith.constant 0 : i32
    %c0_i32_0 = arith.constant 0 : i32
    return %c0_i32 : i32
  }
  func.func @transform_2(%arg0: i32) -> i32 {
    %c0_i32 = arith.constant 0 : i32
    %c0_i32_0 = arith.constant 0 : i32
    return %c0_i32 : i32
  }
  func.func @transform_3(%arg0: i32) -> i32 {
    %c0_i32 = arith.constant 0 : i32
    %c0_i32_0 = arith.constant 0 : i32
    return %c0_i32 : i32
  }
  func.func @transform_4(%arg0: i32) -> i32 {
    %c0_i32 = arith.constant 0 : i32
    %c0_i32_0 = arith.constant 0 : i32
    return %c0_i32 : i32
  }
  func.func @transform_5(%arg0: i32) -> i32 {
    %c0_i32 = arith.constant 0 : i32
    %c0_i32_0 = arith.constant 0 : i32
    return %c0_i32 : i32
  }
  func.func @transform_6(%arg0: i32) -> i32 {
    %c0_i32 = arith.constant 0 : i32
    %c0_i32_0 = arith.constant 0 : i32
    return %c0_i32 : i32
  }
  func.func @transform_7(%arg0: i32) -> i32 {
    %c0_i32 = arith.constant 0 : i32
    %c0_i32_0 = arith.constant 0 : i32
    return %c0_i32 : i32
  }
  func.func @transform_8(%arg0: i32) -> i32 {
    %c0_i32 = arith.constant 0 : i32
    %c0_i32_0 = arith.constant 0 : i32
    return %c0_i32 : i32
  }
  func.func @transform_9(%arg0: i32) -> i32 {
    %c0_i32 = arith.constant 0 : i32
    %c0_i32_0 = arith.constant 0 : i32
    return %c0_i32 : i32
  }
  func.func @transform_10(%arg0: i32) -> i32 {
    %c0_i32 = arith.constant 0 : i32
    %c0_i32_0 = arith.constant 0 : i32
    return %c0_i32 : i32
  }
  func.func @transform_11(%arg0: i32) -> (i32, i32) {
    %c0_i32 = arith.constant 0 : i32
    %c0_i32_0 = arith.constant 0 : i32
    return %arg0, %c0_i32 : i32, i32
  }
}

</mosaic_0001>

<llo_original>
// kernel: tpu_custom_call.1
$region0: #{tpu_custom_call.1}
  #allocation0 [shape = 'u32[]', space=smem, size = 0x4, offset = 0x4, fixed_abs, tag = 'smem constant byte address 0x4 - core index']
  #allocation1 [shape = 'u32[144,128]{1,0:T(1,128)}', space=vmem, size = 0x12000, scoped, tag = 'internal scratch']
  #allocation2 [shape = 'f32[1]{0:T(128)S(6)}', space=smem, size = 0x200, scoped, tag = 'scoped memory for tpu_custom_call.1']
  %s0 = inlined_call_operand.hbm [shape: f32[2,64,128], index: 0, kind: input, shape index: {}]
  %s1 = inlined_call_operand.vmem [shape: f32[10], index: 1, kind: input, shape index: {}]
  %s2 = inlined_call_operand.vmem [shape: f32[5], index: 2, kind: input, shape index: {}]
  %s3 = inlined_call_operand.vmem [shape: f32[25], index: 3, kind: input, shape index: {}]
  %s4 = inlined_call_operand.vmem [shape: f32[5], index: 4, kind: input, shape index: {}]
  %s5 = inlined_call_operand.vmem [shape: f32[25], index: 5, kind: input, shape index: {}]
  %s6 = inlined_call_operand.vmem [shape: f32[5], index: 6, kind: input, shape index: {}]
  %s7 = inlined_call_operand.vmem [shape: f32[25], index: 7, kind: input, shape index: {}]
  %s8 = inlined_call_operand.vmem [shape: f32[5], index: 8, kind: input, shape index: {}]
  %s9 = inlined_call_operand.vmem [shape: f32[5], index: 9, kind: input, shape index: {}]
  %s10 = inlined_call_operand.<no memory space> [shape: f32[1], index: 10, kind: input, shape index: {}]
  %s11 = inlined_call_operand.hbm [shape: f32[64,128], index: 11, kind: output, shape index: {}]
  %s12 = sld [smem:[#allocation0]]
  $region94: #{tpu_custom_call.1} parent=0
    _
  %s14 = ssub.s32 1, %s12
  %s15 = scalar_select 0, %s14, %s12
  %16 = sst [smem:[#allocation2]] %s10
  $region1: #{tpu_custom_call.1} parent=0
    #allocation3 [shape = 'u8[65536]{0}', space=vmem, size = 0x10000, scoped, tag = 'input window, operand 0, single buffered']
    #allocation4 [shape = 's32[1]{0}', space=sflag, size = 0x4, scoped, tag = 'scoped memory for tpu_custom_call.1']
    #allocation5 [shape = 's32[1]{0}', space=sflag, size = 0x4, scoped, tag = 'scoped memory for tpu_custom_call.1']
    #allocation6 [shape = 's32[1]{0}', space=sflag, size = 0x4, scoped, tag = 'scoped memory for tpu_custom_call.1']
    #allocation7 [shape = 'u8[512]{0}', space=smem, size = 0x200, scoped, tag = 'input window, operand 1, single buffered']
    #allocation8 [shape = 'u8[512]{0}', space=smem, size = 0x200, scoped, tag = 'input window, operand 2, single buffered']
    #allocation9 [shape = 's32[1]{0}', space=sflag, size = 0x4, scoped, tag = 'scoped memory for tpu_custom_call.1']
    #allocation10 [shape = 'u8[512]{0}', space=smem, size = 0x200, scoped, tag = 'input window, operand 3, single buffered']
    #allocation11 [shape = 'u8[512]{0}', space=smem, size = 0x200, scoped, tag = 'input window, operand 4, single buffered']
    #allocation12 [shape = 's32[1]{0}', space=sflag, size = 0x4, scoped, tag = 'scoped memory for tpu_custom_call.1']
    #allocation13 [shape = 'u8[512]{0}', space=smem, size = 0x200, scoped, tag = 'input window, operand 5, single buffered']
    #allocation14 [shape = 'u8[512]{0}', space=smem, size = 0x200, scoped, tag = 'input window, operand 6, single buffered']
    #allocation15 [shape = 's32[1]{0}', space=sflag, size = 0x4, scoped, tag = 'scoped memory for tpu_custom_call.1']
    #allocation16 [shape = 'u8[512]{0}', space=smem, size = 0x200, scoped, tag = 'input window, operand 7, single buffered']
    #allocation17 [shape = 'u8[512]{0}', space=smem, size = 0x200, scoped, tag = 'input window, operand 8, single buffered']
    #allocation18 [shape = 's32[1]{0}', space=sflag, size = 0x4, scoped, tag = 'scoped memory for tpu_custom_call.1']
    #allocation19 [shape = 'u8[512]{0}', space=smem, size = 0x200, scoped, tag = 'input window, operand 9, single buffered']
    #allocation20 [shape = 'u8[32768]{0}', space=vmem, size = 0x8000, scoped, tag = 'output window, operand 0, single buffered']
    %17 = vsyncpa [#allocation4], 0
    %18 = vsyncpa [#allocation6], 0
    %19 = vsyncpa [#allocation9], 0
    %20 = vsyncpa [#allocation12], 0
    %21 = vsyncpa [#allocation15], 0
    %22 = vsyncpa [#allocation18], 0
    %23 = vsyncpa [#allocation5], 0
    // Predicated region
    $region2: #{tpu_custom_call.1} parent=1 // pred_check
      _
    $region3: #{tpu_custom_call.1} parent=1 // pred_check_branch
      %25 = sbr.rel (0) target = $region5
    $region4: #{tpu_custom_call.1} parent=1 // pred_region
      %s27 = ssub.s32 2048, 2048
      %28 = vsyncadd [#allocation4], %s27
      %s29 = sshll.u32 [#allocation3], 4
      %s30 = int_to_ptr.vmem [resolvable:$true] %s29
      %35 = dma.hbm_to_vmem [thread:$0]  %s0, 2048, %s30, [#allocation4], 128, 128, 8
    $region5: #{tpu_custom_call.1} parent=1 // pred_fallthru
      _
    // Predicated region
    $region6: #{tpu_custom_call.1} parent=1 // pred_check
      _
    $region7: #{tpu_custom_call.1} parent=1 // pred_check_branch
      %37 = sbr.rel (0) target = $region9
    $region8: #{tpu_custom_call.1} parent=1 // pred_region
      %s39 = ssub.s32 16, 16
      %40 = vsyncadd [#allocation6], %s39
      %s42 = sshll.u32 %s1, 4
      %s43 = int_to_ptr.vmem [resolvable:$true] %s42
      %45 = dma.vmem_to_smem %s43, 16, [#allocation7], [#allocation6]
    $region9: #{tpu_custom_call.1} parent=1 // pred_fallthru
      _
    // Predicated region
    $region10: #{tpu_custom_call.1} parent=1 // pred_check
      _
    $region11: #{tpu_custom_call.1} parent=1 // pred_check_branch
      %47 = sbr.rel (0) target = $region13
    $region12: #{tpu_custom_call.1} parent=1 // pred_region
      %s49 = ssub.s32 16, 16
      %50 = vsyncadd [#allocation9], %s49
      %s52 = sshll.u32 %s2, 4
      %s53 = int_to_ptr.vmem [resolvable:$true] %s52
      %55 = dma.vmem_to_smem %s53, 16, [#allocation8], [#allocation9]
    $region13: #{tpu_custom_call.1} parent=1 // pred_fallthru
      _
    // Predicated region
    $region14: #{tpu_custom_call.1} parent=1 // pred_check
      _
    $region15: #{tpu_custom_call.1} parent=1 // pred_check_branch
      %57 = sbr.rel (0) target = $region17
    $region16: #{tpu_custom_call.1} parent=1 // pred_region
      %s59 = ssub.s32 16, 16
      %60 = vsyncadd [#allocation9], %s59
      %s62 = sshll.u32 %s3, 4
      %s63 = int_to_ptr.vmem [resolvable:$true] %s62
      %65 = dma.vmem_to_smem %s63, 16, [#allocation10], [#allocation9]
    $region17: #{tpu_custom_call.1} parent=1 // pred_fallthru
      _
    // Predicated region
    $region18: #{tpu_custom_call.1} parent=1 // pred_check
      _
    $region19: #{tpu_custom_call.1} parent=1 // pred_check_branch
      %67 = sbr.rel (0) target = $region21
    $region20: #{tpu_custom_call.1} parent=1 // pred_region
      %s69 = ssub.s32 16, 16
      %70 = vsyncadd [#allocation12], %s69
      %s72 = sshll.u32 %s4, 4
      %s73 = int_to_ptr.vmem [resolvable:$true] %s72
      %75 = dma.vmem_to_smem %s73, 16, [#allocation11], [#allocation12]
    $region21: #{tpu_custom_call.1} parent=1 // pred_fallthru
      _
    // Predicated region
    $region22: #{tpu_custom_call.1} parent=1 // pred_check
      _
    $region23: #{tpu_custom_call.1} parent=1 // pred_check_branch
      %77 = sbr.rel (0) target = $region25
    $region24: #{tpu_custom_call.1} parent=1 // pred_region
      %s79 = ssub.s32 16, 16
      %80 = vsyncadd [#allocation12], %s79
      %s82 = sshll.u32 %s5, 4
      %s83 = int_to_ptr.vmem [resolvable:$true] %s82
      %85 = dma.vmem_to_smem %s83, 16, [#allocation13], [#allocation12]
    $region25: #{tpu_custom_call.1} parent=1 // pred_fallthru
      _
    // Predicated region
    $region26: #{tpu_custom_call.1} parent=1 // pred_check
      _
    $region27: #{tpu_custom_call.1} parent=1 // pred_check_branch
      %87 = sbr.rel (0) target = $region29
    $region28: #{tpu_custom_call.1} parent=1 // pred_region
      %s89 = ssub.s32 16, 16
      %90 = vsyncadd [#allocation15], %s89
      %s92 = sshll.u32 %s6, 4
      %s93 = int_to_ptr.vmem [resolvable:$true] %s92
      %95 = dma.vmem_to_smem %s93, 16, [#allocation14], [#allocation15]
    $region29: #{tpu_custom_call.1} parent=1 // pred_fallthru
      _
    // Predicated region
    $region30: #{tpu_custom_call.1} parent=1 // pred_check
      _
    $region31: #{tpu_custom_call.1} parent=1 // pred_check_branch
      %97 = sbr.rel (0) target = $region33
    $region32: #{tpu_custom_call.1} parent=1 // pred_region
      %s99 = ssub.s32 16, 16
      %100 = vsyncadd [#allocation15], %s99
      %s102 = sshll.u32 %s7, 4
      %s103 = int_to_ptr.vmem [resolvable:$true] %s102
      %105 = dma.vmem_to_smem %s103, 16, [#allocation16], [#allocation15]
    $region33: #{tpu_custom_call.1} parent=1 // pred_fallthru
      _
    // Predicated region
    $region34: #{tpu_custom_call.1} parent=1 // pred_check
      _
    $region35: #{tpu_custom_call.1} parent=1 // pred_check_branch
      %107 = sbr.rel (0) target = $region37
    $region36: #{tpu_custom_call.1} parent=1 // pred_region
      %s109 = ssub.s32 16, 16
      %110 = vsyncadd [#allocation18], %s109
      %s112 = sshll.u32 %s8, 4
      %s113 = int_to_ptr.vmem [resolvable:$true] %s112
      %115 = dma.vmem_to_smem %s113, 16, [#allocation17], [#allocation18]
    $region37: #{tpu_custom_call.1} parent=1 // pred_fallthru
      _
    // Predicated region
    $region38: #{tpu_custom_call.1} parent=1 // pred_check
      _
    $region39: #{tpu_custom_call.1} parent=1 // pred_check_branch
      %117 = sbr.rel (0) target = $region41
    $region40: #{tpu_custom_call.1} parent=1 // pred_region
      %s119 = ssub.s32 16, 16
      %120 = vsyncadd [#allocation18], %s119
      %s122 = sshll.u32 %s9, 4
      %s123 = int_to_ptr.vmem [resolvable:$true] %s122
      %125 = dma.vmem_to_smem %s123, 16, [#allocation19], [#allocation18]
    $region41: #{tpu_custom_call.1} parent=1 // pred_fallthru
      _
    // Predicated region
    $region42: #{tpu_custom_call.1} parent=1 // pred_check
      _
    $region43: #{tpu_custom_call.1} parent=1 // pred_check_branch
      %127 = sbr.rel (0) target = $region45
    $region44: #{tpu_custom_call.1} parent=1 // pred_region
      _
    $region45: #{tpu_custom_call.1} parent=1 // pred_fallthru
      _
    // Predicated region
    $region46: #{tpu_custom_call.1} parent=1 // pred_check
      _
    $region47: #{tpu_custom_call.1} parent=1 // pred_check_branch
      %129 = sbr.rel (0) target = $region49
    $region48: #{tpu_custom_call.1} parent=1 // pred_region
      %130 = dma.done [#allocation4], 2048
    $region49: #{tpu_custom_call.1} parent=1 // pred_fallthru
      _
    // Predicated region
    $region50: #{tpu_custom_call.1} parent=1 // pred_check
      _
    $region51: #{tpu_custom_call.1} parent=1 // pred_check_branch
      %132 = sbr.rel (0) target = $region53
    $region52: #{tpu_custom_call.1} parent=1 // pred_region
      %133 = dma.done [#allocation6], 16
    $region53: #{tpu_custom_call.1} parent=1 // pred_fallthru
      _
    // Predicated region
    $region54: #{tpu_custom_call.1} parent=1 // pred_check
      _
    $region55: #{tpu_custom_call.1} parent=1 // pred_check_branch
      %135 = sbr.rel (0) target = $region57
    $region56: #{tpu_custom_call.1} parent=1 // pred_region
      %136 = dma.done [#allocation9], 16
    $region57: #{tpu_custom_call.1} parent=1 // pred_fallthru
      _
    // Predicated region
    $region58: #{tpu_custom_call.1} parent=1 // pred_check
      _
    $region59: #{tpu_custom_call.1} parent=1 // pred_check_branch
      %138 = sbr.rel (0) target = $region61
    $region60: #{tpu_custom_call.1} parent=1 // pred_region
      %139 = dma.done [#allocation9], 16
    $region61: #{tpu_custom_call.1} parent=1 // pred_fallthru
      _
    // Predicated region
    $region62: #{tpu_custom_call.1} parent=1 // pred_check
      _
    $region63: #{tpu_custom_call.1} parent=1 // pred_check_branch
      %141 = sbr.rel (0) target = $region65
    $region64: #{tpu_custom_call.1} parent=1 // pred_region
      %142 = dma.done [#allocation12], 16
    $region65: #{tpu_custom_call.1} parent=1 // pred_fallthru
      _
    // Predicated region
    $region66: #{tpu_custom_call.1} parent=1 // pred_check
      _
    $region67: #{tpu_custom_call.1} parent=1 // pred_check_branch
      %144 = sbr.rel (0) target = $region69
    $region68: #{tpu_custom_call.1} parent=1 // pred_region
      %145 = dma.done [#allocation12], 16
    $region69: #{tpu_custom_call.1} parent=1 // pred_fallthru
      _
    // Predicated region
    $region70: #{tpu_custom_call.1} parent=1 // pred_check
      _
    $region71: #{tpu_custom_call.1} parent=1 // pred_check_branch
      %147 = sbr.rel (0) target = $region73
    $region72: #{tpu_custom_call.1} parent=1 // pred_region
      %148 = dma.done [#allocation15], 16
    $region73: #{tpu_custom_call.1} parent=1 // pred_fallthru
      _
    // Predicated region
    $region74: #{tpu_custom_call.1} parent=1 // pred_check
      _
    $region75: #{tpu_custom_call.1} parent=1 // pred_check_branch
      %150 = sbr.rel (0) target = $region77
    $region76: #{tpu_custom_call.1} parent=1 // pred_region
      %151 = dma.done [#allocation15], 16
    $region77: #{tpu_custom_call.1} parent=1 // pred_fallthru
      _
    // Predicated region
    $region78: #{tpu_custom_call.1} parent=1 // pred_check
      _
    $region79: #{tpu_custom_call.1} parent=1 // pred_check_branch
      %153 = sbr.rel (0) target = $region81
    $region80: #{tpu_custom_call.1} parent=1 // pred_region
      %154 = dma.done [#allocation18], 16
    $region81: #{tpu_custom_call.1} parent=1 // pred_fallthru
      _
    // Predicated region
    $region82: #{tpu_custom_call.1} parent=1 // pred_check
      _
    $region83: #{tpu_custom_call.1} parent=1 // pred_check_branch
      %156 = sbr.rel (0) target = $region85
    $region84: #{tpu_custom_call.1} parent=1 // pred_region
      %157 = dma.done [#allocation18], 16
    $region85: #{tpu_custom_call.1} parent=1 // pred_fallthru
      _
    %158 = sfence
    %v159 = vld [vmem:[#allocation3] sm:$0xff]
    %v160 = vld [vmem:[#allocation3 + $0x8] sm:$0xff]
    %v161 = vld [vmem:[#allocation3 + $0x10] sm:$0xff]
    %v162 = vld [vmem:[#allocation3 + $0x18] sm:$0xff]
    %v163 = vld [vmem:[#allocation3 + $0x20] sm:$0xff]
    %v164 = vld [vmem:[#allocation3 + $0x28] sm:$0xff]
    %v165 = vld [vmem:[#allocation3 + $0x30] sm:$0xff]
    %v166 = vld [vmem:[#allocation3 + $0x38] sm:$0xff]
    %s167 = scalar_lea.vmem [#allocation3], 64
    %v168 = vld [vmem:[%s167] sm:$0xff]
    %v169 = vld [vmem:[%s167 + $0x8] sm:$0xff]
    %v170 = vld [vmem:[%s167 + $0x10] sm:$0xff]
    %v171 = vld [vmem:[%s167 + $0x18] sm:$0xff]
    %v172 = vld [vmem:[%s167 + $0x20] sm:$0xff]
    %v173 = vld [vmem:[%s167 + $0x28] sm:$0xff]
    %v174 = vld [vmem:[%s167 + $0x30] sm:$0xff]
    %v175 = vld [vmem:[%s167 + $0x38] sm:$0xff]
    %s176 = sld [smem:[#allocation7]]
    %v177 = vstv %s176
    %v178 = vmul.f32 %v159, %v177
    %v179 = vmul.f32 %v160, %v177
    %v180 = vmul.f32 %v161, %v177
    %v181 = vmul.f32 %v162, %v177
    %v182 = vmul.f32 %v163, %v177
    %v183 = vmul.f32 %v164, %v177
    %v184 = vmul.f32 %v165, %v177
    %v185 = vmul.f32 %v166, %v177
    %s186 = sld [smem:[#allocation8]]
    %v187 = vstv %s186
    %v188 = vadd.f32 %v178, %v187
    %v189 = vadd.f32 %v179, %v187
    %v190 = vadd.f32 %v180, %v187
    %v191 = vadd.f32 %v181, %v187
    %v192 = vadd.f32 %v182, %v187
    %v193 = vadd.f32 %v183, %v187
    %v194 = vadd.f32 %v184, %v187
    %v195 = vadd.f32 %v185, %v187
    %s196 = sld [smem:[#allocation7 + $0x5]]
    %v197 = vstv %s196
    %v198 = vmul.f32 %v168, %v197
    %v199 = vmul.f32 %v169, %v197
    %v200 = vmul.f32 %v170, %v197
    %v201 = vmul.f32 %v171, %v197
    %v202 = vmul.f32 %v172, %v197
    %v203 = vmul.f32 %v173, %v197
    %v204 = vmul.f32 %v174, %v197
    %v205 = vmul.f32 %v175, %v197
    %v206 = vadd.f32 %v188, %v198
    %v207 = vadd.f32 %v189, %v199
    %v208 = vadd.f32 %v190, %v200
    %v209 = vadd.f32 %v191, %v201
    %v210 = vadd.f32 %v192, %v202
    %v211 = vadd.f32 %v193, %v203
    %v212 = vadd.f32 %v194, %v204
    %v213 = vadd.f32 %v195, %v205
    %v214 = vmax.f32 %v206, 0.0
    %v215 = vmax.f32 %v207, 0.0
    %v216 = vmax.f32 %v208, 0.0
    %v217 = vmax.f32 %v209, 0.0
    %v218 = vmax.f32 %v210, 0.0
    %v219 = vmax.f32 %v211, 0.0
    %v220 = vmax.f32 %v212, 0.0
    %v221 = vmax.f32 %v213, 0.0
    %s222 = sld [smem:[#allocation7 + $0x1]]
    %v223 = vstv %s222
    %v224 = vmul.f32 %v159, %v223
    %v225 = vmul.f32 %v160, %v223
    %v226 = vmul.f32 %v161, %v223
    %v227 = vmul.f32 %v162, %v223
    %v228 = vmul.f32 %v163, %v223
    %v229 = vmul.f32 %v164, %v223
    %v230 = vmul.f32 %v165, %v223
    %v231 = vmul.f32 %v166, %v223
    %s232 = sld [smem:[#allocation8 + $0x1]]
    %v233 = vstv %s232
    %v234 = vadd.f32 %v224, %v233
    %v235 = vadd.f32 %v225, %v233
    %v236 = vadd.f32 %v226, %v233
    %v237 = vadd.f32 %v227, %v233
    %v238 = vadd.f32 %v228, %v233
    %v239 = vadd.f32 %v229, %v233
    %v240 = vadd.f32 %v230, %v233
    %v241 = vadd.f32 %v231, %v233
    %s242 = sld [smem:[#allocation7 + $0x6]]
    %v243 = vstv %s242
    %v244 = vmul.f32 %v168, %v243
    %v245 = vmul.f32 %v169, %v243
    %v246 = vmul.f32 %v170, %v243
    %v247 = vmul.f32 %v171, %v243
    %v248 = vmul.f32 %v172, %v243
    %v249 = vmul.f32 %v173, %v243
    %v250 = vmul.f32 %v174, %v243
    %v251 = vmul.f32 %v175, %v243
    %v252 = vadd.f32 %v234, %v244
    %v253 = vadd.f32 %v235, %v245
    %v254 = vadd.f32 %v236, %v246
    %v255 = vadd.f32 %v237, %v247
    %v256 = vadd.f32 %v238, %v248
    %v257 = vadd.f32 %v239, %v249
    %v258 = vadd.f32 %v240, %v250
    %v259 = vadd.f32 %v241, %v251
    %v260 = vmax.f32 %v252, 0.0
    %v261 = vmax.f32 %v253, 0.0
    %v262 = vmax.f32 %v254, 0.0
    %v263 = vmax.f32 %v255, 0.0
    %v264 = vmax.f32 %v256, 0.0
    %v265 = vmax.f32 %v257, 0.0
    %v266 = vmax.f32 %v258, 0.0
    %v267 = vmax.f32 %v259, 0.0
    %s268 = sld [smem:[#allocation7 + $0x2]]
    %v269 = vstv %s268
    %v270 = vmul.f32 %v159, %v269
    %v271 = vmul.f32 %v160, %v269
    %v272 = vmul.f32 %v161, %v269
    %v273 = vmul.f32 %v162, %v269
    %v274 = vmul.f32 %v163, %v269
    %v275 = vmul.f32 %v164, %v269
    %v276 = vmul.f32 %v165, %v269
    %v277 = vmul.f32 %v166, %v269
    %s278 = sld [smem:[#allocation8 + $0x2]]
    %v279 = vstv %s278
    %v280 = vadd.f32 %v270, %v279
    %v281 = vadd.f32 %v271, %v279
    %v282 = vadd.f32 %v272, %v279
    %v283 = vadd.f32 %v273, %v279
    %v284 = vadd.f32 %v274, %v279
    %v285 = vadd.f32 %v275, %v279
    %v286 = vadd.f32 %v276, %v279
    %v287 = vadd.f32 %v277, %v279
    %s288 = sld [smem:[#allocation7 + $0x7]]
    %v289 = vstv %s288
    %v290 = vmul.f32 %v168, %v289
    %v291 = vmul.f32 %v169, %v289
    %v292 = vmul.f32 %v170, %v289
    %v293 = vmul.f32 %v171, %v289
    %v294 = vmul.f32 %v172, %v289
    %v295 = vmul.f32 %v173, %v289
    %v296 = vmul.f32 %v174, %v289
    %v297 = vmul.f32 %v175, %v289
    %v298 = vadd.f32 %v280, %v290
    %v299 = vadd.f32 %v281, %v291
    %v300 = vadd.f32 %v282, %v292
    %v301 = vadd.f32 %v283, %v293
    %v302 = vadd.f32 %v284, %v294
    %v303 = vadd.f32 %v285, %v295
    %v304 = vadd.f32 %v286, %v296
    %v305 = vadd.f32 %v287, %v297
    %v306 = vmax.f32 %v298, 0.0
    %v307 = vmax.f32 %v299, 0.0
    %v308 = vmax.f32 %v300, 0.0
    %v309 = vmax.f32 %v301, 0.0
    %v310 = vmax.f32 %v302, 0.0
    %v311 = vmax.f32 %v303, 0.0
    %v312 = vmax.f32 %v304, 0.0
    %v313 = vmax.f32 %v305, 0.0
    %s314 = sld [smem:[#allocation7 + $0x3]]
    %v315 = vstv %s314
    %v316 = vmul.f32 %v159, %v315
    %v317 = vmul.f32 %v160, %v315
    %v318 = vmul.f32 %v161, %v315
    %v319 = vmul.f32 %v162, %v315
    %v320 = vmul.f32 %v163, %v315
    %v321 = vmul.f32 %v164, %v315
    %v322 = vmul.f32 %v165, %v315
    %v323 = vmul.f32 %v166, %v315
    %s324 = sld [smem:[#allocation8 + $0x3]]
    %v325 = vstv %s324
    %v326 = vadd.f32 %v316, %v325
    %v327 = vadd.f32 %v317, %v325
    %v328 = vadd.f32 %v318, %v325
    %v329 = vadd.f32 %v319, %v325
    %v330 = vadd.f32 %v320, %v325
    %v331 = vadd.f32 %v321, %v325
    %v332 = vadd.f32 %v322, %v325
    %v333 = vadd.f32 %v323, %v325
    %s334 = sld [smem:[#allocation7 + $0x8]]
    %v335 = vstv %s334
    %v336 = vmul.f32 %v168, %v335
    %v337 = vmul.f32 %v169, %v335
    %v338 = vmul.f32 %v170, %v335
    %v339 = vmul.f32 %v171, %v335
    %v340 = vmul.f32 %v172, %v335
    %v341 = vmul.f32 %v173, %v335
    %v342 = vmul.f32 %v174, %v335
    %v343 = vmul.f32 %v175, %v335
    %v344 = vadd.f32 %v326, %v336
    %v345 = vadd.f32 %v327, %v337
    %v346 = vadd.f32 %v328, %v338
    %v347 = vadd.f32 %v329, %v339
    %v348 = vadd.f32 %v330, %v340
    %v349 = vadd.f32 %v331, %v341
    %v350 = vadd.f32 %v332, %v342
    %v351 = vadd.f32 %v333, %v343
    %v352 = vmax.f32 %v344, 0.0
    %v353 = vmax.f32 %v345, 0.0
    %v354 = vmax.f32 %v346, 0.0
    %v355 = vmax.f32 %v347, 0.0
    %v356 = vmax.f32 %v348, 0.0
    %v357 = vmax.f32 %v349, 0.0
    %v358 = vmax.f32 %v350, 0.0
    %v359 = vmax.f32 %v351, 0.0
    %s360 = sld [smem:[#allocation7 + $0x4]]
    %v361 = vstv %s360
    %v362 = vmul.f32 %v159, %v361
    %v363 = vmul.f32 %v160, %v361
    %v364 = vmul.f32 %v161, %v361
    %v365 = vmul.f32 %v162, %v361
    %v366 = vmul.f32 %v163, %v361
    %v367 = vmul.f32 %v164, %v361
    %v368 = vmul.f32 %v165, %v361
    %v369 = vmul.f32 %v166, %v361
    %s370 = sld [smem:[#allocation8 + $0x4]]
    %v371 = vstv %s370
    %v372 = vadd.f32 %v362, %v371
    %v373 = vadd.f32 %v363, %v371
    %v374 = vadd.f32 %v364, %v371
    %v375 = vadd.f32 %v365, %v371
    %v376 = vadd.f32 %v366, %v371
    %v377 = vadd.f32 %v367, %v371
    %v378 = vadd.f32 %v368, %v371
    %v379 = vadd.f32 %v369, %v371
    %s380 = sld [smem:[#allocation7 + $0x9]]
    %v381 = vstv %s380
    %v382 = vmul.f32 %v168, %v381
    %v383 = vmul.f32 %v169, %v381
    %v384 = vmul.f32 %v170, %v381
    %v385 = vmul.f32 %v171, %v381
    %v386 = vmul.f32 %v172, %v381
    %v387 = vmul.f32 %v173, %v381
    %v388 = vmul.f32 %v174, %v381
    %v389 = vmul.f32 %v175, %v381
    %v390 = vadd.f32 %v372, %v382
    %v391 = vadd.f32 %v373, %v383
    %v392 = vadd.f32 %v374, %v384
    %v393 = vadd.f32 %v375, %v385
    %v394 = vadd.f32 %v376, %v386
    %v395 = vadd.f32 %v377, %v387
    %v396 = vadd.f32 %v378, %v388
    %v397 = vadd.f32 %v379, %v389
    %v398 = vmax.f32 %v390, 0.0
    %v399 = vmax.f32 %v391, 0.0
    %v400 = vmax.f32 %v392, 0.0
    %v401 = vmax.f32 %v393, 0.0
    %v402 = vmax.f32 %v394, 0.0
    %v403 = vmax.f32 %v395, 0.0
    %v404 = vmax.f32 %v396, 0.0
    %v405 = vmax.f32 %v397, 0.0
    %s406 = sld [smem:[#allocation10]]
    %v407 = vstv %s406
    %v408 = vmul.f32 %v214, %v407
    %v409 = vmul.f32 %v215, %v407
    %v410 = vmul.f32 %v216, %v407
    %v411 = vmul.f32 %v217, %v407
    %v412 = vmul.f32 %v218, %v407
    %v413 = vmul.f32 %v219, %v407
    %v414 = vmul.f32 %v220, %v407
    %v415 = vmul.f32 %v221, %v407
    %s416 = sld [smem:[#allocation11]]
    %v417 = vstv %s416
    %v418 = vadd.f32 %v408, %v417
    %v419 = vadd.f32 %v409, %v417
    %v420 = vadd.f32 %v410, %v417
    %v421 = vadd.f32 %v411, %v417
    %v422 = vadd.f32 %v412, %v417
    %v423 = vadd.f32 %v413, %v417
    %v424 = vadd.f32 %v414, %v417
    %v425 = vadd.f32 %v415, %v417
    %s426 = sld [smem:[#allocation10 + $0x5]]
    %v427 = vstv %s426
    %v428 = vmul.f32 %v260, %v427
    %v429 = vmul.f32 %v261, %v427
    %v430 = vmul.f32 %v262, %v427
    %v431 = vmul.f32 %v263, %v427
    %v432 = vmul.f32 %v264, %v427
    %v433 = vmul.f32 %v265, %v427
    %v434 = vmul.f32 %v266, %v427
    %v435 = vmul.f32 %v267, %v427
    %v436 = vadd.f32 %v418, %v428
    %v437 = vadd.f32 %v419, %v429
    %v438 = vadd.f32 %v420, %v430
    %v439 = vadd.f32 %v421, %v431
    %v440 = vadd.f32 %v422, %v432
    %v441 = vadd.f32 %v423, %v433
    %v442 = vadd.f32 %v424, %v434
    %v443 = vadd.f32 %v425, %v435
    %s444 = sld [smem:[#allocation10 + $0xa]]
    %v445 = vstv %s444
    %v446 = vmul.f32 %v306, %v445
    %v447 = vmul.f32 %v307, %v445
    %v448 = vmul.f32 %v308, %v445
    %v449 = vmul.f32 %v309, %v445
    %v450 = vmul.f32 %v310, %v445
    %v451 = vmul.f32 %v311, %v445
    %v452 = vmul.f32 %v312, %v445
    %v453 = vmul.f32 %v313, %v445
    %v454 = vadd.f32 %v436, %v446
    %v455 = vadd.f32 %v437, %v447
    %v456 = vadd.f32 %v438, %v448
    %v457 = vadd.f32 %v439, %v449
    %v458 = vadd.f32 %v440, %v450
    %v459 = vadd.f32 %v441, %v451
    %v460 = vadd.f32 %v442, %v452
    %v461 = vadd.f32 %v443, %v453
    %s462 = sld [smem:[#allocation10 + $0xf]]
    %v463 = vstv %s462
    %v464 = vmul.f32 %v352, %v463
    %v465 = vmul.f32 %v353, %v463
    %v466 = vmul.f32 %v354, %v463
    %v467 = vmul.f32 %v355, %v463
    %v468 = vmul.f32 %v356, %v463
    %v469 = vmul.f32 %v357, %v463
    %v470 = vmul.f32 %v358, %v463
    %v471 = vmul.f32 %v359, %v463
    %v472 = vadd.f32 %v454, %v464
    %v473 = vadd.f32 %v455, %v465
    %v474 = vadd.f32 %v456, %v466
    %v475 = vadd.f32 %v457, %v467
    %v476 = vadd.f32 %v458, %v468
    %v477 = vadd.f32 %v459, %v469
    %v478 = vadd.f32 %v460, %v470
    %v479 = vadd.f32 %v461, %v471
    %s480 = sld [smem:[#allocation10 + $0x14]]
    %v481 = vstv %s480
    %v482 = vmul.f32 %v398, %v481
    %v483 = vmul.f32 %v399, %v481
    %v484 = vmul.f32 %v400, %v481
    %v485 = vmul.f32 %v401, %v481
    %v486 = vmul.f32 %v402, %v481
    %v487 = vmul.f32 %v403, %v481
    %v488 = vmul.f32 %v404, %v481
    %v489 = vmul.f32 %v405, %v481
    %v490 = vadd.f32 %v472, %v482
    %v491 = vadd.f32 %v473, %v483
    %v492 = vadd.f32 %v474, %v484
    %v493 = vadd.f32 %v475, %v485
    %v494 = vadd.f32 %v476, %v486
    %v495 = vadd.f32 %v477, %v487
    %v496 = vadd.f32 %v478, %v488
    %v497 = vadd.f32 %v479, %v489
    %v498 = vmax.f32 %v490, 0.0
    %v499 = vmax.f32 %v491, 0.0
    %v500 = vmax.f32 %v492, 0.0
    %v501 = vmax.f32 %v493, 0.0
    %v502 = vmax.f32 %v494, 0.0
    %v503 = vmax.f32 %v495, 0.0
    %v504 = vmax.f32 %v496, 0.0
    %v505 = vmax.f32 %v497, 0.0
    %s506 = sld [smem:[#allocation10 + $0x1]]
    %v507 = vstv %s506
    %v508 = vmul.f32 %v214, %v507
    %v509 = vmul.f32 %v215, %v507
    %v510 = vmul.f32 %v216, %v507
    %v511 = vmul.f32 %v217, %v507
    %v512 = vmul.f32 %v218, %v507
    %v513 = vmul.f32 %v219, %v507
    %v514 = vmul.f32 %v220, %v507
    %v515 = vmul.f32 %v221, %v507
    %s516 = sld [smem:[#allocation11 + $0x1]]
    %v517 = vstv %s516
    %v518 = vadd.f32 %v508, %v517
    %v519 = vadd.f32 %v509, %v517
    %v520 = vadd.f32 %v510, %v517
    %v521 = vadd.f32 %v511, %v517
    %v522 = vadd.f32 %v512, %v517
    %v523 = vadd.f32 %v513, %v517
    %v524 = vadd.f32 %v514, %v517
    %v525 = vadd.f32 %v515, %v517
    %s526 = sld [smem:[#allocation10 + $0x6]]
    %v527 = vstv %s526
    %v528 = vmul.f32 %v260, %v527
    %v529 = vmul.f32 %v261, %v527
    %v530 = vmul.f32 %v262, %v527
    %v531 = vmul.f32 %v263, %v527
    %v532 = vmul.f32 %v264, %v527
    %v533 = vmul.f32 %v265, %v527
    %v534 = vmul.f32 %v266, %v527
    %v535 = vmul.f32 %v267, %v527
    %v536 = vadd.f32 %v518, %v528
    %v537 = vadd.f32 %v519, %v529
    %v538 = vadd.f32 %v520, %v530
    %v539 = vadd.f32 %v521, %v531
    %v540 = vadd.f32 %v522, %v532
    %v541 = vadd.f32 %v523, %v533
    %v542 = vadd.f32 %v524, %v534
    %v543 = vadd.f32 %v525, %v535
    %s544 = sld [smem:[#allocation10 + $0xb]]
    %v545 = vstv %s544
    %v546 = vmul.f32 %v306, %v545
    %v547 = vmul.f32 %v307, %v545
    %v548 = vmul.f32 %v308, %v545
    %v549 = vmul.f32 %v309, %v545
    %v550 = vmul.f32 %v310, %v545
    %v551 = vmul.f32 %v311, %v545
    %v552 = vmul.f32 %v312, %v545
    %v553 = vmul.f32 %v313, %v545
    %v554 = vadd.f32 %v536, %v546
    %v555 = vadd.f32 %v537, %v547
    %v556 = vadd.f32 %v538, %v548
    %v557 = vadd.f32 %v539, %v549
    %v558 = vadd.f32 %v540, %v550
    %v559 = vadd.f32 %v541, %v551
    %v560 = vadd.f32 %v542, %v552
    %v561 = vadd.f32 %v543, %v553
    %s562 = sld [smem:[#allocation10 + $0x10]]
    %v563 = vstv %s562
    %v564 = vmul.f32 %v352, %v563
    %v565 = vmul.f32 %v353, %v563
    %v566 = vmul.f32 %v354, %v563
    %v567 = vmul.f32 %v355, %v563
    %v568 = vmul.f32 %v356, %v563
    %v569 = vmul.f32 %v357, %v563
    %v570 = vmul.f32 %v358, %v563
    %v571 = vmul.f32 %v359, %v563
    %v572 = vadd.f32 %v554, %v564
    %v573 = vadd.f32 %v555, %v565
    %v574 = vadd.f32 %v556, %v566
    %v575 = vadd.f32 %v557, %v567
    %v576 = vadd.f32 %v558, %v568
    %v577 = vadd.f32 %v559, %v569
    %v578 = vadd.f32 %v560, %v570
    %v579 = vadd.f32 %v561, %v571
    %s580 = sld [smem:[#allocation10 + $0x15]]
    %v581 = vstv %s580
    %v582 = vmul.f32 %v398, %v581
    %v583 = vmul.f32 %v399, %v581
    %v584 = vmul.f32 %v400, %v581
    %v585 = vmul.f32 %v401, %v581
    %v586 = vmul.f32 %v402, %v581
    %v587 = vmul.f32 %v403, %v581
    %v588 = vmul.f32 %v404, %v581
    %v589 = vmul.f32 %v405, %v581
    %v590 = vadd.f32 %v572, %v582
    %v591 = vadd.f32 %v573, %v583
    %v592 = vadd.f32 %v574, %v584
    %v593 = vadd.f32 %v575, %v585
    %v594 = vadd.f32 %v576, %v586
    %v595 = vadd.f32 %v577, %v587
    %v596 = vadd.f32 %v578, %v588
    %v597 = vadd.f32 %v579, %v589
    %v598 = vmax.f32 %v590, 0.0
    %v599 = vmax.f32 %v591, 0.0
    %v600 = vmax.f32 %v592, 0.0
    %v601 = vmax.f32 %v593, 0.0
    %v602 = vmax.f32 %v594, 0.0
    %v603 = vmax.f32 %v595, 0.0
    %v604 = vmax.f32 %v596, 0.0
    %v605 = vmax.f32 %v597, 0.0
    %s606 = sld [smem:[#allocation10 + $0x2]]
    %v607 = vstv %s606
    %v608 = vmul.f32 %v214, %v607
    %v609 = vmul.f32 %v215, %v607
    %v610 = vmul.f32 %v216, %v607
    %v611 = vmul.f32 %v217, %v607
    %v612 = vmul.f32 %v218, %v607
    %v613 = vmul.f32 %v219, %v607
    %v614 = vmul.f32 %v220, %v607
    %v615 = vmul.f32 %v221, %v607
    %s616 = sld [smem:[#allocation11 + $0x2]]
    %v617 = vstv %s616
    %v618 = vadd.f32 %v608, %v617
    %v619 = vadd.f32 %v609, %v617
    %v620 = vadd.f32 %v610, %v617
    %v621 = vadd.f32 %v611, %v617
    %v622 = vadd.f32 %v612, %v617
    %v623 = vadd.f32 %v613, %v617
    %v624 = vadd.f32 %v614, %v617
    %v625 = vadd.f32 %v615, %v617
    %s626 = sld [smem:[#allocation10 + $0x7]]
    %v627 = vstv %s626
    %v628 = vmul.f32 %v260, %v627
    %v629 = vmul.f32 %v261, %v627
    %v630 = vmul.f32 %v262, %v627
    %v631 = vmul.f32 %v263, %v627
    %v632 = vmul.f32 %v264, %v627
    %v633 = vmul.f32 %v265, %v627
    %v634 = vmul.f32 %v266, %v627
    %v635 = vmul.f32 %v267, %v627
    %v636 = vadd.f32 %v618, %v628
    %v637 = vadd.f32 %v619, %v629
    %v638 = vadd.f32 %v620, %v630
    %v639 = vadd.f32 %v621, %v631
    %v640 = vadd.f32 %v622, %v632
    %v641 = vadd.f32 %v623, %v633
    %v642 = vadd.f32 %v624, %v634
    %v643 = vadd.f32 %v625, %v635
    %s644 = sld [smem:[#allocation10 + $0xc]]
    %v645 = vstv %s644
    %v646 = vmul.f32 %v306, %v645
    %v647 = vmul.f32 %v307, %v645
    %v648 = vmul.f32 %v308, %v645
    %v649 = vmul.f32 %v309, %v645
    %v650 = vmul.f32 %v310, %v645
    %v651 = vmul.f32 %v311, %v645
    %v652 = vmul.f32 %v312, %v645
    %v653 = vmul.f32 %v313, %v645
    %v654 = vadd.f32 %v636, %v646
    %v655 = vadd.f32 %v637, %v647
    %v656 = vadd.f32 %v638, %v648
    %v657 = vadd.f32 %v639, %v649
    %v658 = vadd.f32 %v640, %v650
    %v659 = vadd.f32 %v641, %v651
    %v660 = vadd.f32 %v642, %v652
    %v661 = vadd.f32 %v643, %v653
    %s662 = sld [smem:[#allocation10 + $0x11]]
    %v663 = vstv %s662
    %v664 = vmul.f32 %v352, %v663
    %v665 = vmul.f32 %v353, %v663
    %v666 = vmul.f32 %v354, %v663
    %v667 = vmul.f32 %v355, %v663
    %v668 = vmul.f32 %v356, %v663
    %v669 = vmul.f32 %v357, %v663
    %v670 = vmul.f32 %v358, %v663
    %v671 = vmul.f32 %v359, %v663
    %v672 = vadd.f32 %v654, %v664
    %v673 = vadd.f32 %v655, %v665
    %v674 = vadd.f32 %v656, %v666
    %v675 = vadd.f32 %v657, %v667
    %v676 = vadd.f32 %v658, %v668
    %v677 = vadd.f32 %v659, %v669
    %v678 = vadd.f32 %v660, %v670
    %v679 = vadd.f32 %v661, %v671
    %s680 = sld [smem:[#allocation10 + $0x16]]
    %v681 = vstv %s680
    %v682 = vmul.f32 %v398, %v681
    %v683 = vmul.f32 %v399, %v681
    %v684 = vmul.f32 %v400, %v681
    %v685 = vmul.f32 %v401, %v681
    %v686 = vmul.f32 %v402, %v681
    %v687 = vmul.f32 %v403, %v681
    %v688 = vmul.f32 %v404, %v681
    %v689 = vmul.f32 %v405, %v681
    %v690 = vadd.f32 %v672, %v682
    %v691 = vadd.f32 %v673, %v683
    %v692 = vadd.f32 %v674, %v684
    %v693 = vadd.f32 %v675, %v685
    %v694 = vadd.f32 %v676, %v686
    %v695 = vadd.f32 %v677, %v687
    %v696 = vadd.f32 %v678, %v688
    %v697 = vadd.f32 %v679, %v689
    %v698 = vmax.f32 %v690, 0.0
    %v699 = vmax.f32 %v691, 0.0
    %v700 = vmax.f32 %v692, 0.0
    %v701 = vmax.f32 %v693, 0.0
    %v702 = vmax.f32 %v694, 0.0
    %v703 = vmax.f32 %v695, 0.0
    %v704 = vmax.f32 %v696, 0.0
    %v705 = vmax.f32 %v697, 0.0
    %s706 = sld [smem:[#allocation10 + $0x3]]
    %v707 = vstv %s706
    %v708 = vmul.f32 %v214, %v707
    %v709 = vmul.f32 %v215, %v707
    %v710 = vmul.f32 %v216, %v707
    %v711 = vmul.f32 %v217, %v707
    %v712 = vmul.f32 %v218, %v707
    %v713 = vmul.f32 %v219, %v707
    %v714 = vmul.f32 %v220, %v707
    %v715 = vmul.f32 %v221, %v707
    %s716 = sld [smem:[#allocation11 + $0x3]]
    %v717 = vstv %s716
    %v718 = vadd.f32 %v708, %v717
    %v719 = vadd.f32 %v709, %v717
    %v720 = vadd.f32 %v710, %v717
    %v721 = vadd.f32 %v711, %v717
    %v722 = vadd.f32 %v712, %v717
    %v723 = vadd.f32 %v713, %v717
    %v724 = vadd.f32 %v714, %v717
    %v725 = vadd.f32 %v715, %v717
    %s726 = sld [smem:[#allocation10 + $0x8]]
    %v727 = vstv %s726
    %v728 = vmul.f32 %v260, %v727
    %v729 = vmul.f32 %v261, %v727
    %v730 = vmul.f32 %v262, %v727
    %v731 = vmul.f32 %v263, %v727
    %v732 = vmul.f32 %v264, %v727
    %v733 = vmul.f32 %v265, %v727
    %v734 = vmul.f32 %v266, %v727
    %v735 = vmul.f32 %v267, %v727
    %v736 = vadd.f32 %v718, %v728
    %v737 = vadd.f32 %v719, %v729
    %v738 = vadd.f32 %v720, %v730
    %v739 = vadd.f32 %v721, %v731
    %v740 = vadd.f32 %v722, %v732
    %v741 = vadd.f32 %v723, %v733
    %v742 = vadd.f32 %v724, %v734
    %v743 = vadd.f32 %v725, %v735
    %s744 = sld [smem:[#allocation10 + $0xd]]
    %v745 = vstv %s744
    %v746 = vmul.f32 %v306, %v745
    %v747 = vmul.f32 %v307, %v745
    %v748 = vmul.f32 %v308, %v745
    %v749 = vmul.f32 %v309, %v745
    %v750 = vmul.f32 %v310, %v745
    %v751 = vmul.f32 %v311, %v745
    %v752 = vmul.f32 %v312, %v745
    %v753 = vmul.f32 %v313, %v745
    %v754 = vadd.f32 %v736, %v746
    %v755 = vadd.f32 %v737, %v747
    %v756 = vadd.f32 %v738, %v748
    %v757 = vadd.f32 %v739, %v749
    %v758 = vadd.f32 %v740, %v750
    %v759 = vadd.f32 %v741, %v751
    %v760 = vadd.f32 %v742, %v752
    %v761 = vadd.f32 %v743, %v753
    %s762 = sld [smem:[#allocation10 + $0x12]]
    %v763 = vstv %s762
    %v764 = vmul.f32 %v352, %v763
    %v765 = vmul.f32 %v353, %v763
    %v766 = vmul.f32 %v354, %v763
    %v767 = vmul.f32 %v355, %v763
    %v768 = vmul.f32 %v356, %v763
    %v769 = vmul.f32 %v357, %v763
    %v770 = vmul.f32 %v358, %v763
    %v771 = vmul.f32 %v359, %v763
    %v772 = vadd.f32 %v754, %v764
    %v773 = vadd.f32 %v755, %v765
    %v774 = vadd.f32 %v756, %v766
    %v775 = vadd.f32 %v757, %v767
    %v776 = vadd.f32 %v758, %v768
    %v777 = vadd.f32 %v759, %v769
    %v778 = vadd.f32 %v760, %v770
    %v779 = vadd.f32 %v761, %v771
    %s780 = sld [smem:[#allocation10 + $0x17]]
    %v781 = vstv %s780
    %v782 = vmul.f32 %v398, %v781
    %v783 = vmul.f32 %v399, %v781
    %v784 = vmul.f32 %v400, %v781
    %v785 = vmul.f32 %v401, %v781
    %v786 = vmul.f32 %v402, %v781
    %v787 = vmul.f32 %v403, %v781
    %v788 = vmul.f32 %v404, %v781
    %v789 = vmul.f32 %v405, %v781
    %v790 = vadd.f32 %v772, %v782
    %v791 = vadd.f32 %v773, %v783
    %v792 = vadd.f32 %v774, %v784
    %v793 = vadd.f32 %v775, %v785
    %v794 = vadd.f32 %v776, %v786
    %v795 = vadd.f32 %v777, %v787
    %v796 = vadd.f32 %v778, %v788
    %v797 = vadd.f32 %v779, %v789
    %v798 = vmax.f32 %v790, 0.0
    %v799 = vmax.f32 %v791, 0.0
    %v800 = vmax.f32 %v792, 0.0
    %v801 = vmax.f32 %v793, 0.0
    %v802 = vmax.f32 %v794, 0.0
    %v803 = vmax.f32 %v795, 0.0
    %v804 = vmax.f32 %v796, 0.0
    %v805 = vmax.f32 %v797, 0.0
    %s806 = sld [smem:[#allocation10 + $0x4]]
    %v807 = vstv %s806
    %v808 = vmul.f32 %v214, %v807
    %v809 = vmul.f32 %v215, %v807
    %v810 = vmul.f32 %v216, %v807
    %v811 = vmul.f32 %v217, %v807
    %v812 = vmul.f32 %v218, %v807
    %v813 = vmul.f32 %v219, %v807
    %v814 = vmul.f32 %v220, %v807
    %v815 = vmul.f32 %v221, %v807
    %s816 = sld [smem:[#allocation11 + $0x4]]
    %v817 = vstv %s816
    %v818 = vadd.f32 %v808, %v817
    %v819 = vadd.f32 %v809, %v817
    %v820 = vadd.f32 %v810, %v817
    %v821 = vadd.f32 %v811, %v817
    %v822 = vadd.f32 %v812, %v817
    %v823 = vadd.f32 %v813, %v817
    %v824 = vadd.f32 %v814, %v817
    %v825 = vadd.f32 %v815, %v817
    %s826 = sld [smem:[#allocation10 + $0x9]]
    %v827 = vstv %s826
    %v828 = vmul.f32 %v260, %v827
    %v829 = vmul.f32 %v261, %v827
    %v830 = vmul.f32 %v262, %v827
    %v831 = vmul.f32 %v263, %v827
    %v832 = vmul.f32 %v264, %v827
    %v833 = vmul.f32 %v265, %v827
    %v834 = vmul.f32 %v266, %v827
    %v835 = vmul.f32 %v267, %v827
    %v836 = vadd.f32 %v818, %v828
    %v837 = vadd.f32 %v819, %v829
    %v838 = vadd.f32 %v820, %v830
    %v839 = vadd.f32 %v821, %v831
    %v840 = vadd.f32 %v822, %v832
    %v841 = vadd.f32 %v823, %v833
    %v842 = vadd.f32 %v824, %v834
    %v843 = vadd.f32 %v825, %v835
    %s844 = sld [smem:[#allocation10 + $0xe]]
    %v845 = vstv %s844
    %v846 = vmul.f32 %v306, %v845
    %v847 = vmul.f32 %v307, %v845
    %v848 = vmul.f32 %v308, %v845
    %v849 = vmul.f32 %v309, %v845
    %v850 = vmul.f32 %v310, %v845
    %v851 = vmul.f32 %v311, %v845
    %v852 = vmul.f32 %v312, %v845
    %v853 = vmul.f32 %v313, %v845
    %v854 = vadd.f32 %v836, %v846
    %v855 = vadd.f32 %v837, %v847
    %v856 = vadd.f32 %v838, %v848
    %v857 = vadd.f32 %v839, %v849
    %v858 = vadd.f32 %v840, %v850
    %v859 = vadd.f32 %v841, %v851
    %v860 = vadd.f32 %v842, %v852
    %v861 = vadd.f32 %v843, %v853
    %s862 = sld [smem:[#allocation10 + $0x13]]
    %v863 = vstv %s862
    %v864 = vmul.f32 %v352, %v863
    %v865 = vmul.f32 %v353, %v863
    %v866 = vmul.f32 %v354, %v863
    %v867 = vmul.f32 %v355, %v863
    %v868 = vmul.f32 %v356, %v863
    %v869 = vmul.f32 %v357, %v863
    %v870 = vmul.f32 %v358, %v863
    %v871 = vmul.f32 %v359, %v863
    %v872 = vadd.f32 %v854, %v864
    %v873 = vadd.f32 %v855, %v865
    %v874 = vadd.f32 %v856, %v866
    %v875 = vadd.f32 %v857, %v867
    %v876 = vadd.f32 %v858, %v868
    %v877 = vadd.f32 %v859, %v869
    %v878 = vadd.f32 %v860, %v870
    %v879 = vadd.f32 %v861, %v871
    %s880 = sld [smem:[#allocation10 + $0x18]]
    %v881 = vstv %s880
    %v882 = vmul.f32 %v398, %v881
    %v883 = vmul.f32 %v399, %v881
    %v884 = vmul.f32 %v400, %v881
    %v885 = vmul.f32 %v401, %v881
    %v886 = vmul.f32 %v402, %v881
    %v887 = vmul.f32 %v403, %v881
    %v888 = vmul.f32 %v404, %v881
    %v889 = vmul.f32 %v405, %v881
    %v890 = vadd.f32 %v872, %v882
    %v891 = vadd.f32 %v873, %v883
    %v892 = vadd.f32 %v874, %v884
    %v893 = vadd.f32 %v875, %v885
    %v894 = vadd.f32 %v876, %v886
    %v895 = vadd.f32 %v877, %v887
    %v896 = vadd.f32 %v878, %v888
    %v897 = vadd.f32 %v879, %v889
    %v898 = vmax.f32 %v890, 0.0
    %v899 = vmax.f32 %v891, 0.0
    %v900 = vmax.f32 %v892, 0.0
    %v901 = vmax.f32 %v893, 0.0
    %v902 = vmax.f32 %v894, 0.0
    %v903 = vmax.f32 %v895, 0.0
    %v904 = vmax.f32 %v896, 0.0
    %v905 = vmax.f32 %v897, 0.0
    %s906 = sld [smem:[#allocation13]]
    %v907 = vstv %s906
    %v908 = vmul.f32 %v498, %v907
    %v909 = vmul.f32 %v499, %v907
    %v910 = vmul.f32 %v500, %v907
    %v911 = vmul.f32 %v501, %v907
    %v912 = vmul.f32 %v502, %v907
    %v913 = vmul.f32 %v503, %v907
    %v914 = vmul.f32 %v504, %v907
    %v915 = vmul.f32 %v505, %v907
    %s916 = sld [smem:[#allocation14]]
    %v917 = vstv %s916
    %v918 = vadd.f32 %v908, %v917
    %v919 = vadd.f32 %v909, %v917
    %v920 = vadd.f32 %v910, %v917
    %v921 = vadd.f32 %v911, %v917
    %v922 = vadd.f32 %v912, %v917
    %v923 = vadd.f32 %v913, %v917
    %v924 = vadd.f32 %v914, %v917
    %v925 = vadd.f32 %v915, %v917
    %s926 = sld [smem:[#allocation13 + $0x5]]
    %v927 = vstv %s926
    %v928 = vmul.f32 %v598, %v927
    %v929 = vmul.f32 %v599, %v927
    %v930 = vmul.f32 %v600, %v927
    %v931 = vmul.f32 %v601, %v927
    %v932 = vmul.f32 %v602, %v927
    %v933 = vmul.f32 %v603, %v927
    %v934 = vmul.f32 %v604, %v927
    %v935 = vmul.f32 %v605, %v927
    %v936 = vadd.f32 %v918, %v928
    %v937 = vadd.f32 %v919, %v929
    %v938 = vadd.f32 %v920, %v930
    %v939 = vadd.f32 %v921, %v931
    %v940 = vadd.f32 %v922, %v932
    %v941 = vadd.f32 %v923, %v933
    %v942 = vadd.f32 %v924, %v934
    %v943 = vadd.f32 %v925, %v935
    %s944 = sld [smem:[#allocation13 + $0xa]]
    %v945 = vstv %s944
    %v946 = vmul.f32 %v698, %v945
    %v947 = vmul.f32 %v699, %v945
    %v948 = vmul.f32 %v700, %v945
    %v949 = vmul.f32 %v701, %v945
    %v950 = vmul.f32 %v702, %v945
    %v951 = vmul.f32 %v703, %v945
    %v952 = vmul.f32 %v704, %v945
    %v953 = vmul.f32 %v705, %v945
    %v954 = vadd.f32 %v936, %v946
    %v955 = vadd.f32 %v937, %v947
    %v956 = vadd.f32 %v938, %v948
    %v957 = vadd.f32 %v939, %v949
    %v958 = vadd.f32 %v940, %v950
    %v959 = vadd.f32 %v941, %v951
    %v960 = vadd.f32 %v942, %v952
    %v961 = vadd.f32 %v943, %v953
    %s962 = sld [smem:[#allocation13 + $0xf]]
    %v963 = vstv %s962
    %v964 = vmul.f32 %v798, %v963
    %v965 = vmul.f32 %v799, %v963
    %v966 = vmul.f32 %v800, %v963
    %v967 = vmul.f32 %v801, %v963
    %v968 = vmul.f32 %v802, %v963
    %v969 = vmul.f32 %v803, %v963
    %v970 = vmul.f32 %v804, %v963
    %v971 = vmul.f32 %v805, %v963
    %v972 = vadd.f32 %v954, %v964
    %v973 = vadd.f32 %v955, %v965
    %v974 = vadd.f32 %v956, %v966
    %v975 = vadd.f32 %v957, %v967
    %v976 = vadd.f32 %v958, %v968
    %v977 = vadd.f32 %v959, %v969
    %v978 = vadd.f32 %v960, %v970
    %v979 = vadd.f32 %v961, %v971
    %s980 = sld [smem:[#allocation13 + $0x14]]
    %v981 = vstv %s980
    %v982 = vmul.f32 %v898, %v981
    %v983 = vmul.f32 %v899, %v981
    %v984 = vmul.f32 %v900, %v981
    %v985 = vmul.f32 %v901, %v981
    %v986 = vmul.f32 %v902, %v981
    %v987 = vmul.f32 %v903, %v981
    %v988 = vmul.f32 %v904, %v981
    %v989 = vmul.f32 %v905, %v981
    %v990 = vadd.f32 %v972, %v982
    %v991 = vadd.f32 %v973, %v983
    %v992 = vadd.f32 %v974, %v984
    %v993 = vadd.f32 %v975, %v985
    %v994 = vadd.f32 %v976, %v986
    %v995 = vadd.f32 %v977, %v987
    %v996 = vadd.f32 %v978, %v988
    %v997 = vadd.f32 %v979, %v989
    %v998 = vmax.f32 %v990, 0.0
    %v999 = vmax.f32 %v991, 0.0
    %v1000 = vmax.f32 %v992, 0.0
    %v1001 = vmax.f32 %v993, 0.0
    %v1002 = vmax.f32 %v994, 0.0
    %v1003 = vmax.f32 %v995, 0.0
    %v1004 = vmax.f32 %v996, 0.0
    %v1005 = vmax.f32 %v997, 0.0
    %s1006 = sld [smem:[#allocation13 + $0x1]]
    %v1007 = vstv %s1006
    %v1008 = vmul.f32 %v498, %v1007
    %v1009 = vmul.f32 %v499, %v1007
    %v1010 = vmul.f32 %v500, %v1007
    %v1011 = vmul.f32 %v501, %v1007
    %v1012 = vmul.f32 %v502, %v1007
    %v1013 = vmul.f32 %v503, %v1007
    %v1014 = vmul.f32 %v504, %v1007
    %v1015 = vmul.f32 %v505, %v1007
    %s1016 = sld [smem:[#allocation14 + $0x1]]
    %v1017 = vstv %s1016
    %v1018 = vadd.f32 %v1008, %v1017
    %v1019 = vadd.f32 %v1009, %v1017
    %v1020 = vadd.f32 %v1010, %v1017
    %v1021 = vadd.f32 %v1011, %v1017
    %v1022 = vadd.f32 %v1012, %v1017
    %v1023 = vadd.f32 %v1013, %v1017
    %v1024 = vadd.f32 %v1014, %v1017
    %v1025 = vadd.f32 %v1015, %v1017
    %s1026 = sld [smem:[#allocation13 + $0x6]]
    %v1027 = vstv %s1026
    %v1028 = vmul.f32 %v598, %v1027
    %v1029 = vmul.f32 %v599, %v1027
    %v1030 = vmul.f32 %v600, %v1027
    %v1031 = vmul.f32 %v601, %v1027
    %v1032 = vmul.f32 %v602, %v1027
    %v1033 = vmul.f32 %v603, %v1027
    %v1034 = vmul.f32 %v604, %v1027
    %v1035 = vmul.f32 %v605, %v1027
    %v1036 = vadd.f32 %v1018, %v1028
    %v1037 = vadd.f32 %v1019, %v1029
    %v1038 = vadd.f32 %v1020, %v1030
    %v1039 = vadd.f32 %v1021, %v1031
    %v1040 = vadd.f32 %v1022, %v1032
    %v1041 = vadd.f32 %v1023, %v1033
    %v1042 = vadd.f32 %v1024, %v1034
    %v1043 = vadd.f32 %v1025, %v1035
    %s1044 = sld [smem:[#allocation13 + $0xb]]
    %v1045 = vstv %s1044
    %v1046 = vmul.f32 %v698, %v1045
    %v1047 = vmul.f32 %v699, %v1045
    %v1048 = vmul.f32 %v700, %v1045
    %v1049 = vmul.f32 %v701, %v1045
    %v1050 = vmul.f32 %v702, %v1045
    %v1051 = vmul.f32 %v703, %v1045
    %v1052 = vmul.f32 %v704, %v1045
    %v1053 = vmul.f32 %v705, %v1045
    %v1054 = vadd.f32 %v1036, %v1046
    %v1055 = vadd.f32 %v1037, %v1047
    %v1056 = vadd.f32 %v1038, %v1048
    %v1057 = vadd.f32 %v1039, %v1049
    %v1058 = vadd.f32 %v1040, %v1050
    %v1059 = vadd.f32 %v1041, %v1051
    %v1060 = vadd.f32 %v1042, %v1052
    %v1061 = vadd.f32 %v1043, %v1053
    %s1062 = sld [smem:[#allocation13 + $0x10]]
    %v1063 = vstv %s1062
    %v1064 = vmul.f32 %v798, %v1063
    %v1065 = vmul.f32 %v799, %v1063
    %v1066 = vmul.f32 %v800, %v1063
    %v1067 = vmul.f32 %v801, %v1063
    %v1068 = vmul.f32 %v802, %v1063
    %v1069 = vmul.f32 %v803, %v1063
    %v1070 = vmul.f32 %v804, %v1063
    %v1071 = vmul.f32 %v805, %v1063
    %v1072 = vadd.f32 %v1054, %v1064
    %v1073 = vadd.f32 %v1055, %v1065
    %v1074 = vadd.f32 %v1056, %v1066
    %v1075 = vadd.f32 %v1057, %v1067
    %v1076 = vadd.f32 %v1058, %v1068
    %v1077 = vadd.f32 %v1059, %v1069
    %v1078 = vadd.f32 %v1060, %v1070
    %v1079 = vadd.f32 %v1061, %v1071
    %s1080 = sld [smem:[#allocation13 + $0x15]]
    %v1081 = vstv %s1080
    %v1082 = vmul.f32 %v898, %v1081
    %v1083 = vmul.f32 %v899, %v1081
    %v1084 = vmul.f32 %v900, %v1081
    %v1085 = vmul.f32 %v901, %v1081
    %v1086 = vmul.f32 %v902, %v1081
    %v1087 = vmul.f32 %v903, %v1081
    %v1088 = vmul.f32 %v904, %v1081
    %v1089 = vmul.f32 %v905, %v1081
    %v1090 = vadd.f32 %v1072, %v1082
    %v1091 = vadd.f32 %v1073, %v1083
    %v1092 = vadd.f32 %v1074, %v1084
    %v1093 = vadd.f32 %v1075, %v1085
    %v1094 = vadd.f32 %v1076, %v1086
    %v1095 = vadd.f32 %v1077, %v1087
    %v1096 = vadd.f32 %v1078, %v1088
    %v1097 = vadd.f32 %v1079, %v1089
    %v1098 = vmax.f32 %v1090, 0.0
    %v1099 = vmax.f32 %v1091, 0.0
    %v1100 = vmax.f32 %v1092, 0.0
    %v1101 = vmax.f32 %v1093, 0.0
    %v1102 = vmax.f32 %v1094, 0.0
    %v1103 = vmax.f32 %v1095, 0.0
    %v1104 = vmax.f32 %v1096, 0.0
    %v1105 = vmax.f32 %v1097, 0.0
    %s1106 = sld [smem:[#allocation13 + $0x2]]
    %v1107 = vstv %s1106
    %v1108 = vmul.f32 %v498, %v1107
    %v1109 = vmul.f32 %v499, %v1107
    %v1110 = vmul.f32 %v500, %v1107
    %v1111 = vmul.f32 %v501, %v1107
    %v1112 = vmul.f32 %v502, %v1107
    %v1113 = vmul.f32 %v503, %v1107
    %v1114 = vmul.f32 %v504, %v1107
    %v1115 = vmul.f32 %v505, %v1107
    %s1116 = sld [smem:[#allocation14 + $0x2]]
    %v1117 = vstv %s1116
    %v1118 = vadd.f32 %v1108, %v1117
    %v1119 = vadd.f32 %v1109, %v1117
    %v1120 = vadd.f32 %v1110, %v1117
    %v1121 = vadd.f32 %v1111, %v1117
    %v1122 = vadd.f32 %v1112, %v1117
    %v1123 = vadd.f32 %v1113, %v1117
    %v1124 = vadd.f32 %v1114, %v1117
    %v1125 = vadd.f32 %v1115, %v1117
    %s1126 = sld [smem:[#allocation13 + $0x7]]
    %v1127 = vstv %s1126
    %v1128 = vmul.f32 %v598, %v1127
    %v1129 = vmul.f32 %v599, %v1127
    %v1130 = vmul.f32 %v600, %v1127
    %v1131 = vmul.f32 %v601, %v1127
    %v1132 = vmul.f32 %v602, %v1127
    %v1133 = vmul.f32 %v603, %v1127
    %v1134 = vmul.f32 %v604, %v1127
    %v1135 = vmul.f32 %v605, %v1127
    %v1136 = vadd.f32 %v1118, %v1128
    %v1137 = vadd.f32 %v1119, %v1129
    %v1138 = vadd.f32 %v1120, %v1130
    %v1139 = vadd.f32 %v1121, %v1131
    %v1140 = vadd.f32 %v1122, %v1132
    %v1141 = vadd.f32 %v1123, %v1133
    %v1142 = vadd.f32 %v1124, %v1134
    %v1143 = vadd.f32 %v1125, %v1135
    %s1144 = sld [smem:[#allocation13 + $0xc]]
    %v1145 = vstv %s1144
    %v1146 = vmul.f32 %v698, %v1145
    %v1147 = vmul.f32 %v699, %v1145
    %v1148 = vmul.f32 %v700, %v1145
    %v1149 = vmul.f32 %v701, %v1145
    %v1150 = vmul.f32 %v702, %v1145
    %v1151 = vmul.f32 %v703, %v1145
    %v1152 = vmul.f32 %v704, %v1145
    %v1153 = vmul.f32 %v705, %v1145
    %v1154 = vadd.f32 %v1136, %v1146
    %v1155 = vadd.f32 %v1137, %v1147
    %v1156 = vadd.f32 %v1138, %v1148
    %v1157 = vadd.f32 %v1139, %v1149
    %v1158 = vadd.f32 %v1140, %v1150
    %v1159 = vadd.f32 %v1141, %v1151
    %v1160 = vadd.f32 %v1142, %v1152
    %v1161 = vadd.f32 %v1143, %v1153
    %s1162 = sld [smem:[#allocation13 + $0x11]]
    %v1163 = vstv %s1162
    %v1164 = vmul.f32 %v798, %v1163
    %v1165 = vmul.f32 %v799, %v1163
    %v1166 = vmul.f32 %v800, %v1163
    %v1167 = vmul.f32 %v801, %v1163
    %v1168 = vmul.f32 %v802, %v1163
    %v1169 = vmul.f32 %v803, %v1163
    %v1170 = vmul.f32 %v804, %v1163
    %v1171 = vmul.f32 %v805, %v1163
    %v1172 = vadd.f32 %v1154, %v1164
    %v1173 = vadd.f32 %v1155, %v1165
    %v1174 = vadd.f32 %v1156, %v1166
    %v1175 = vadd.f32 %v1157, %v1167
    %v1176 = vadd.f32 %v1158, %v1168
    %v1177 = vadd.f32 %v1159, %v1169
    %v1178 = vadd.f32 %v1160, %v1170
    %v1179 = vadd.f32 %v1161, %v1171
    %s1180 = sld [smem:[#allocation13 + $0x16]]
    %v1181 = vstv %s1180
    %v1182 = vmul.f32 %v898, %v1181
    %v1183 = vmul.f32 %v899, %v1181
    %v1184 = vmul.f32 %v900, %v1181
    %v1185 = vmul.f32 %v901, %v1181
    %v1186 = vmul.f32 %v902, %v1181
    %v1187 = vmul.f32 %v903, %v1181
    %v1188 = vmul.f32 %v904, %v1181
    %v1189 = vmul.f32 %v905, %v1181
    %v1190 = vadd.f32 %v1172, %v1182
    %v1191 = vadd.f32 %v1173, %v1183
    %v1192 = vadd.f32 %v1174, %v1184
    %v1193 = vadd.f32 %v1175, %v1185
    %v1194 = vadd.f32 %v1176, %v1186
    %v1195 = vadd.f32 %v1177, %v1187
    %v1196 = vadd.f32 %v1178, %v1188
    %v1197 = vadd.f32 %v1179, %v1189
    %v1198 = vmax.f32 %v1190, 0.0
    %v1199 = vmax.f32 %v1191, 0.0
    %v1200 = vmax.f32 %v1192, 0.0
    %v1201 = vmax.f32 %v1193, 0.0
    %v1202 = vmax.f32 %v1194, 0.0
    %v1203 = vmax.f32 %v1195, 0.0
    %v1204 = vmax.f32 %v1196, 0.0
    %v1205 = vmax.f32 %v1197, 0.0
    %s1206 = sld [smem:[#allocation13 + $0x3]]
    %v1207 = vstv %s1206
    %v1208 = vmul.f32 %v498, %v1207
    %v1209 = vmul.f32 %v499, %v1207
    %v1210 = vmul.f32 %v500, %v1207
    %v1211 = vmul.f32 %v501, %v1207
    %v1212 = vmul.f32 %v502, %v1207
    %v1213 = vmul.f32 %v503, %v1207
    %v1214 = vmul.f32 %v504, %v1207
    %v1215 = vmul.f32 %v505, %v1207
    %s1216 = sld [smem:[#allocation14 + $0x3]]
    %v1217 = vstv %s1216
    %v1218 = vadd.f32 %v1208, %v1217
    %v1219 = vadd.f32 %v1209, %v1217
    %v1220 = vadd.f32 %v1210, %v1217
    %v1221 = vadd.f32 %v1211, %v1217
    %v1222 = vadd.f32 %v1212, %v1217
    %v1223 = vadd.f32 %v1213, %v1217
    %v1224 = vadd.f32 %v1214, %v1217
    %v1225 = vadd.f32 %v1215, %v1217
    %s1226 = sld [smem:[#allocation13 + $0x8]]
    %v1227 = vstv %s1226
    %v1228 = vmul.f32 %v598, %v1227
    %v1229 = vmul.f32 %v599, %v1227
    %v1230 = vmul.f32 %v600, %v1227
    %v1231 = vmul.f32 %v601, %v1227
    %v1232 = vmul.f32 %v602, %v1227
    %v1233 = vmul.f32 %v603, %v1227
    %v1234 = vmul.f32 %v604, %v1227
    %v1235 = vmul.f32 %v605, %v1227
    %v1236 = vadd.f32 %v1218, %v1228
    %v1237 = vadd.f32 %v1219, %v1229
    %v1238 = vadd.f32 %v1220, %v1230
    %v1239 = vadd.f32 %v1221, %v1231
    %v1240 = vadd.f32 %v1222, %v1232
    %v1241 = vadd.f32 %v1223, %v1233
    %v1242 = vadd.f32 %v1224, %v1234
    %v1243 = vadd.f32 %v1225, %v1235
    %s1244 = sld [smem:[#allocation13 + $0xd]]
    %v1245 = vstv %s1244
    %v1246 = vmul.f32 %v698, %v1245
    %v1247 = vmul.f32 %v699, %v1245
    %v1248 = vmul.f32 %v700, %v1245
    %v1249 = vmul.f32 %v701, %v1245
    %v1250 = vmul.f32 %v702, %v1245
    %v1251 = vmul.f32 %v703, %v1245
    %v1252 = vmul.f32 %v704, %v1245
    %v1253 = vmul.f32 %v705, %v1245
    %v1254 = vadd.f32 %v1236, %v1246
    %v1255 = vadd.f32 %v1237, %v1247
    %v1256 = vadd.f32 %v1238, %v1248
    %v1257 = vadd.f32 %v1239, %v1249
    %v1258 = vadd.f32 %v1240, %v1250
    %v1259 = vadd.f32 %v1241, %v1251
    %v1260 = vadd.f32 %v1242, %v1252
    %v1261 = vadd.f32 %v1243, %v1253
    %s1262 = sld [smem:[#allocation13 + $0x12]]
    %v1263 = vstv %s1262
    %v1264 = vmul.f32 %v798, %v1263
    %v1265 = vmul.f32 %v799, %v1263
    %v1266 = vmul.f32 %v800, %v1263
    %v1267 = vmul.f32 %v801, %v1263
    %v1268 = vmul.f32 %v802, %v1263
    %v1269 = vmul.f32 %v803, %v1263
    %v1270 = vmul.f32 %v804, %v1263
    %v1271 = vmul.f32 %v805, %v1263
    %v1272 = vadd.f32 %v1254, %v1264
    %v1273 = vadd.f32 %v1255, %v1265
    %v1274 = vadd.f32 %v1256, %v1266
    %v1275 = vadd.f32 %v1257, %v1267
    %v1276 = vadd.f32 %v1258, %v1268
    %v1277 = vadd.f32 %v1259, %v1269
    %v1278 = vadd.f32 %v1260, %v1270
    %v1279 = vadd.f32 %v1261, %v1271
    %s1280 = sld [smem:[#allocation13 + $0x17]]
    %v1281 = vstv %s1280
    %v1282 = vmul.f32 %v898, %v1281
    %v1283 = vmul.f32 %v899, %v1281
    %v1284 = vmul.f32 %v900, %v1281
    %v1285 = vmul.f32 %v901, %v1281
    %v1286 = vmul.f32 %v902, %v1281
    %v1287 = vmul.f32 %v903, %v1281
    %v1288 = vmul.f32 %v904, %v1281
    %v1289 = vmul.f32 %v905, %v1281
    %v1290 = vadd.f32 %v1272, %v1282
    %v1291 = vadd.f32 %v1273, %v1283
    %v1292 = vadd.f32 %v1274, %v1284
    %v1293 = vadd.f32 %v1275, %v1285
    %v1294 = vadd.f32 %v1276, %v1286
    %v1295 = vadd.f32 %v1277, %v1287
    %v1296 = vadd.f32 %v1278, %v1288
    %v1297 = vadd.f32 %v1279, %v1289
    %v1298 = vmax.f32 %v1290, 0.0
    %v1299 = vmax.f32 %v1291, 0.0
    %v1300 = vmax.f32 %v1292, 0.0
    %v1301 = vmax.f32 %v1293, 0.0
    %v1302 = vmax.f32 %v1294, 0.0
    %v1303 = vmax.f32 %v1295, 0.0
    %v1304 = vmax.f32 %v1296, 0.0
    %v1305 = vmax.f32 %v1297, 0.0
    %s1306 = sld [smem:[#allocation13 + $0x4]]
    %v1307 = vstv %s1306
    %v1308 = vmul.f32 %v498, %v1307
    %v1309 = vmul.f32 %v499, %v1307
    %v1310 = vmul.f32 %v500, %v1307
    %v1311 = vmul.f32 %v501, %v1307
    %v1312 = vmul.f32 %v502, %v1307
    %v1313 = vmul.f32 %v503, %v1307
    %v1314 = vmul.f32 %v504, %v1307
    %v1315 = vmul.f32 %v505, %v1307
    %s1316 = sld [smem:[#allocation14 + $0x4]]
    %v1317 = vstv %s1316
    %v1318 = vadd.f32 %v1308, %v1317
    %v1319 = vadd.f32 %v1309, %v1317
    %v1320 = vadd.f32 %v1310, %v1317
    %v1321 = vadd.f32 %v1311, %v1317
    %v1322 = vadd.f32 %v1312, %v1317
    %v1323 = vadd.f32 %v1313, %v1317
    %v1324 = vadd.f32 %v1314, %v1317
    %v1325 = vadd.f32 %v1315, %v1317
    %s1326 = sld [smem:[#allocation13 + $0x9]]
    %v1327 = vstv %s1326
    %v1328 = vmul.f32 %v598, %v1327
    %v1329 = vmul.f32 %v599, %v1327
    %v1330 = vmul.f32 %v600, %v1327
    %v1331 = vmul.f32 %v601, %v1327
    %v1332 = vmul.f32 %v602, %v1327
    %v1333 = vmul.f32 %v603, %v1327
    %v1334 = vmul.f32 %v604, %v1327
    %v1335 = vmul.f32 %v605, %v1327
    %v1336 = vadd.f32 %v1318, %v1328
    %v1337 = vadd.f32 %v1319, %v1329
    %v1338 = vadd.f32 %v1320, %v1330
    %v1339 = vadd.f32 %v1321, %v1331
    %v1340 = vadd.f32 %v1322, %v1332
    %v1341 = vadd.f32 %v1323, %v1333
    %v1342 = vadd.f32 %v1324, %v1334
    %v1343 = vadd.f32 %v1325, %v1335
    %s1344 = sld [smem:[#allocation13 + $0xe]]
    %v1345 = vstv %s1344
    %v1346 = vmul.f32 %v698, %v1345
    %v1347 = vmul.f32 %v699, %v1345
    %v1348 = vmul.f32 %v700, %v1345
    %v1349 = vmul.f32 %v701, %v1345
    %v1350 = vmul.f32 %v702, %v1345
    %v1351 = vmul.f32 %v703, %v1345
    %v1352 = vmul.f32 %v704, %v1345
    %v1353 = vmul.f32 %v705, %v1345
    %v1354 = vadd.f32 %v1336, %v1346
    %v1355 = vadd.f32 %v1337, %v1347
    %v1356 = vadd.f32 %v1338, %v1348
    %v1357 = vadd.f32 %v1339, %v1349
    %v1358 = vadd.f32 %v1340, %v1350
    %v1359 = vadd.f32 %v1341, %v1351
    %v1360 = vadd.f32 %v1342, %v1352
    %v1361 = vadd.f32 %v1343, %v1353
    %s1362 = sld [smem:[#allocation13 + $0x13]]
    %v1363 = vstv %s1362
    %v1364 = vmul.f32 %v798, %v1363
    %v1365 = vmul.f32 %v799, %v1363
    %v1366 = vmul.f32 %v800, %v1363
    %v1367 = vmul.f32 %v801, %v1363
    %v1368 = vmul.f32 %v802, %v1363
    %v1369 = vmul.f32 %v803, %v1363
    %v1370 = vmul.f32 %v804, %v1363
    %v1371 = vmul.f32 %v805, %v1363
    %v1372 = vadd.f32 %v1354, %v1364
    %v1373 = vadd.f32 %v1355, %v1365
    %v1374 = vadd.f32 %v1356, %v1366
    %v1375 = vadd.f32 %v1357, %v1367
    %v1376 = vadd.f32 %v1358, %v1368
    %v1377 = vadd.f32 %v1359, %v1369
    %v1378 = vadd.f32 %v1360, %v1370
    %v1379 = vadd.f32 %v1361, %v1371
    %s1380 = sld [smem:[#allocation13 + $0x18]]
    %v1381 = vstv %s1380
    %v1382 = vmul.f32 %v898, %v1381
    %v1383 = vmul.f32 %v899, %v1381
    %v1384 = vmul.f32 %v900, %v1381
    %v1385 = vmul.f32 %v901, %v1381
    %v1386 = vmul.f32 %v902, %v1381
    %v1387 = vmul.f32 %v903, %v1381
    %v1388 = vmul.f32 %v904, %v1381
    %v1389 = vmul.f32 %v905, %v1381
    %v1390 = vadd.f32 %v1372, %v1382
    %v1391 = vadd.f32 %v1373, %v1383
    %v1392 = vadd.f32 %v1374, %v1384
    %v1393 = vadd.f32 %v1375, %v1385
    %v1394 = vadd.f32 %v1376, %v1386
    %v1395 = vadd.f32 %v1377, %v1387
    %v1396 = vadd.f32 %v1378, %v1388
    %v1397 = vadd.f32 %v1379, %v1389
    %v1398 = vmax.f32 %v1390, 0.0
    %v1399 = vmax.f32 %v1391, 0.0
    %v1400 = vmax.f32 %v1392, 0.0
    %v1401 = vmax.f32 %v1393, 0.0
    %v1402 = vmax.f32 %v1394, 0.0
    %v1403 = vmax.f32 %v1395, 0.0
    %v1404 = vmax.f32 %v1396, 0.0
    %v1405 = vmax.f32 %v1397, 0.0
    %s1406 = sld [smem:[#allocation16]]
    %v1407 = vstv %s1406
    %v1408 = vmul.f32 %v998, %v1407
    %v1409 = vmul.f32 %v999, %v1407
    %v1410 = vmul.f32 %v1000, %v1407
    %v1411 = vmul.f32 %v1001, %v1407
    %v1412 = vmul.f32 %v1002, %v1407
    %v1413 = vmul.f32 %v1003, %v1407
    %v1414 = vmul.f32 %v1004, %v1407
    %v1415 = vmul.f32 %v1005, %v1407
    %s1416 = sld [smem:[#allocation17]]
    %v1417 = vstv %s1416
    %v1418 = vadd.f32 %v1408, %v1417
    %v1419 = vadd.f32 %v1409, %v1417
    %v1420 = vadd.f32 %v1410, %v1417
    %v1421 = vadd.f32 %v1411, %v1417
    %v1422 = vadd.f32 %v1412, %v1417
    %v1423 = vadd.f32 %v1413, %v1417
    %v1424 = vadd.f32 %v1414, %v1417
    %v1425 = vadd.f32 %v1415, %v1417
    %s1426 = sld [smem:[#allocation16 + $0x5]]
    %v1427 = vstv %s1426
    %v1428 = vmul.f32 %v1098, %v1427
    %v1429 = vmul.f32 %v1099, %v1427
    %v1430 = vmul.f32 %v1100, %v1427
    %v1431 = vmul.f32 %v1101, %v1427
    %v1432 = vmul.f32 %v1102, %v1427
    %v1433 = vmul.f32 %v1103, %v1427
    %v1434 = vmul.f32 %v1104, %v1427
    %v1435 = vmul.f32 %v1105, %v1427
    %v1436 = vadd.f32 %v1418, %v1428
    %v1437 = vadd.f32 %v1419, %v1429
    %v1438 = vadd.f32 %v1420, %v1430
    %v1439 = vadd.f32 %v1421, %v1431
    %v1440 = vadd.f32 %v1422, %v1432
    %v1441 = vadd.f32 %v1423, %v1433
    %v1442 = vadd.f32 %v1424, %v1434
    %v1443 = vadd.f32 %v1425, %v1435
    %s1444 = sld [smem:[#allocation16 + $0xa]]
    %v1445 = vstv %s1444
    %v1446 = vmul.f32 %v1198, %v1445
    %v1447 = vmul.f32 %v1199, %v1445
    %v1448 = vmul.f32 %v1200, %v1445
    %v1449 = vmul.f32 %v1201, %v1445
    %v1450 = vmul.f32 %v1202, %v1445
    %v1451 = vmul.f32 %v1203, %v1445
    %v1452 = vmul.f32 %v1204, %v1445
    %v1453 = vmul.f32 %v1205, %v1445
    %v1454 = vadd.f32 %v1436, %v1446
    %v1455 = vadd.f32 %v1437, %v1447
    %v1456 = vadd.f32 %v1438, %v1448
    %v1457 = vadd.f32 %v1439, %v1449
    %v1458 = vadd.f32 %v1440, %v1450
    %v1459 = vadd.f32 %v1441, %v1451
    %v1460 = vadd.f32 %v1442, %v1452
    %v1461 = vadd.f32 %v1443, %v1453
    %s1462 = sld [smem:[#allocation16 + $0xf]]
    %v1463 = vstv %s1462
    %v1464 = vmul.f32 %v1298, %v1463
    %v1465 = vmul.f32 %v1299, %v1463
    %v1466 = vmul.f32 %v1300, %v1463
    %v1467 = vmul.f32 %v1301, %v1463
    %v1468 = vmul.f32 %v1302, %v1463
    %v1469 = vmul.f32 %v1303, %v1463
    %v1470 = vmul.f32 %v1304, %v1463
    %v1471 = vmul.f32 %v1305, %v1463
    %v1472 = vadd.f32 %v1454, %v1464
    %v1473 = vadd.f32 %v1455, %v1465
    %v1474 = vadd.f32 %v1456, %v1466
    %v1475 = vadd.f32 %v1457, %v1467
    %v1476 = vadd.f32 %v1458, %v1468
    %v1477 = vadd.f32 %v1459, %v1469
    %v1478 = vadd.f32 %v1460, %v1470
    %v1479 = vadd.f32 %v1461, %v1471
    %s1480 = sld [smem:[#allocation16 + $0x14]]
    %v1481 = vstv %s1480
    %v1482 = vmul.f32 %v1398, %v1481
    %v1483 = vmul.f32 %v1399, %v1481
    %v1484 = vmul.f32 %v1400, %v1481
    %v1485 = vmul.f32 %v1401, %v1481
    %v1486 = vmul.f32 %v1402, %v1481
    %v1487 = vmul.f32 %v1403, %v1481
    %v1488 = vmul.f32 %v1404, %v1481
    %v1489 = vmul.f32 %v1405, %v1481
    %v1490 = vadd.f32 %v1472, %v1482
    %v1491 = vadd.f32 %v1473, %v1483
    %v1492 = vadd.f32 %v1474, %v1484
    %v1493 = vadd.f32 %v1475, %v1485
    %v1494 = vadd.f32 %v1476, %v1486
    %v1495 = vadd.f32 %v1477, %v1487
    %v1496 = vadd.f32 %v1478, %v1488
    %v1497 = vadd.f32 %v1479, %v1489
    %v1498 = vmax.f32 %v1490, 0.0
    %v1499 = vmax.f32 %v1491, 0.0
    %v1500 = vmax.f32 %v1492, 0.0
    %v1501 = vmax.f32 %v1493, 0.0
    %v1502 = vmax.f32 %v1494, 0.0
    %v1503 = vmax.f32 %v1495, 0.0
    %v1504 = vmax.f32 %v1496, 0.0
    %v1505 = vmax.f32 %v1497, 0.0
    %s1506 = sld [smem:[#allocation16 + $0x1]]
    %v1507 = vstv %s1506
    %v1508 = vmul.f32 %v998, %v1507
    %v1509 = vmul.f32 %v999, %v1507
    %v1510 = vmul.f32 %v1000, %v1507
    %v1511 = vmul.f32 %v1001, %v1507
    %v1512 = vmul.f32 %v1002, %v1507
    %v1513 = vmul.f32 %v1003, %v1507
    %v1514 = vmul.f32 %v1004, %v1507
    %v1515 = vmul.f32 %v1005, %v1507
    %s1516 = sld [smem:[#allocation17 + $0x1]]
    %v1517 = vstv %s1516
    %v1518 = vadd.f32 %v1508, %v1517
    %v1519 = vadd.f32 %v1509, %v1517
    %v1520 = vadd.f32 %v1510, %v1517
    %v1521 = vadd.f32 %v1511, %v1517
    %v1522 = vadd.f32 %v1512, %v1517
    %v1523 = vadd.f32 %v1513, %v1517
    %v1524 = vadd.f32 %v1514, %v1517
    %v1525 = vadd.f32 %v1515, %v1517
    %s1526 = sld [smem:[#allocation16 + $0x6]]
    %v1527 = vstv %s1526
    %v1528 = vmul.f32 %v1098, %v1527
    %v1529 = vmul.f32 %v1099, %v1527
    %v1530 = vmul.f32 %v1100, %v1527
    %v1531 = vmul.f32 %v1101, %v1527
    %v1532 = vmul.f32 %v1102, %v1527
    %v1533 = vmul.f32 %v1103, %v1527
    %v1534 = vmul.f32 %v1104, %v1527
    %v1535 = vmul.f32 %v1105, %v1527
    %v1536 = vadd.f32 %v1518, %v1528
    %v1537 = vadd.f32 %v1519, %v1529
    %v1538 = vadd.f32 %v1520, %v1530
    %v1539 = vadd.f32 %v1521, %v1531
    %v1540 = vadd.f32 %v1522, %v1532
    %v1541 = vadd.f32 %v1523, %v1533
    %v1542 = vadd.f32 %v1524, %v1534
    %v1543 = vadd.f32 %v1525, %v1535
    %s1544 = sld [smem:[#allocation16 + $0xb]]
    %v1545 = vstv %s1544
    %v1546 = vmul.f32 %v1198, %v1545
    %v1547 = vmul.f32 %v1199, %v1545
    %v1548 = vmul.f32 %v1200, %v1545
    %v1549 = vmul.f32 %v1201, %v1545
    %v1550 = vmul.f32 %v1202, %v1545
    %v1551 = vmul.f32 %v1203, %v1545
    %v1552 = vmul.f32 %v1204, %v1545
    %v1553 = vmul.f32 %v1205, %v1545
    %v1554 = vadd.f32 %v1536, %v1546
    %v1555 = vadd.f32 %v1537, %v1547
    %v1556 = vadd.f32 %v1538, %v1548
    %v1557 = vadd.f32 %v1539, %v1549
    %v1558 = vadd.f32 %v1540, %v1550
    %v1559 = vadd.f32 %v1541, %v1551
    %v1560 = vadd.f32 %v1542, %v1552
    %v1561 = vadd.f32 %v1543, %v1553
    %s1562 = sld [smem:[#allocation16 + $0x10]]
    %v1563 = vstv %s1562
    %v1564 = vmul.f32 %v1298, %v1563
    %v1565 = vmul.f32 %v1299, %v1563
    %v1566 = vmul.f32 %v1300, %v1563
    %v1567 = vmul.f32 %v1301, %v1563
    %v1568 = vmul.f32 %v1302, %v1563
    %v1569 = vmul.f32 %v1303, %v1563
    %v1570 = vmul.f32 %v1304, %v1563
    %v1571 = vmul.f32 %v1305, %v1563
    %v1572 = vadd.f32 %v1554, %v1564
    %v1573 = vadd.f32 %v1555, %v1565
    %v1574 = vadd.f32 %v1556, %v1566
    %v1575 = vadd.f32 %v1557, %v1567
    %v1576 = vadd.f32 %v1558, %v1568
    %v1577 = vadd.f32 %v1559, %v1569
    %v1578 = vadd.f32 %v1560, %v1570
    %v1579 = vadd.f32 %v1561, %v1571
    %s1580 = sld [smem:[#allocation16 + $0x15]]
    %v1581 = vstv %s1580
    %v1582 = vmul.f32 %v1398, %v1581
    %v1583 = vmul.f32 %v1399, %v1581
    %v1584 = vmul.f32 %v1400, %v1581
    %v1585 = vmul.f32 %v1401, %v1581
    %v1586 = vmul.f32 %v1402, %v1581
    %v1587 = vmul.f32 %v1403, %v1581
    %v1588 = vmul.f32 %v1404, %v1581
    %v1589 = vmul.f32 %v1405, %v1581
    %v1590 = vadd.f32 %v1572, %v1582
    %v1591 = vadd.f32 %v1573, %v1583
    %v1592 = vadd.f32 %v1574, %v1584
    %v1593 = vadd.f32 %v1575, %v1585
    %v1594 = vadd.f32 %v1576, %v1586
    %v1595 = vadd.f32 %v1577, %v1587
    %v1596 = vadd.f32 %v1578, %v1588
    %v1597 = vadd.f32 %v1579, %v1589
    %v1598 = vmax.f32 %v1590, 0.0
    %v1599 = vmax.f32 %v1591, 0.0
    %v1600 = vmax.f32 %v1592, 0.0
    %v1601 = vmax.f32 %v1593, 0.0
    %v1602 = vmax.f32 %v1594, 0.0
    %v1603 = vmax.f32 %v1595, 0.0
    %v1604 = vmax.f32 %v1596, 0.0
    %v1605 = vmax.f32 %v1597, 0.0
    %s1606 = sld [smem:[#allocation16 + $0x2]]
    %v1607 = vstv %s1606
    %v1608 = vmul.f32 %v998, %v1607
    %v1609 = vmul.f32 %v999, %v1607
    %v1610 = vmul.f32 %v1000, %v1607
    %v1611 = vmul.f32 %v1001, %v1607
    %v1612 = vmul.f32 %v1002, %v1607
    %v1613 = vmul.f32 %v1003, %v1607
    %v1614 = vmul.f32 %v1004, %v1607
    %v1615 = vmul.f32 %v1005, %v1607
    %s1616 = sld [smem:[#allocation17 + $0x2]]
    %v1617 = vstv %s1616
    %v1618 = vadd.f32 %v1608, %v1617
    %v1619 = vadd.f32 %v1609, %v1617
    %v1620 = vadd.f32 %v1610, %v1617
    %v1621 = vadd.f32 %v1611, %v1617
    %v1622 = vadd.f32 %v1612, %v1617
    %v1623 = vadd.f32 %v1613, %v1617
    %v1624 = vadd.f32 %v1614, %v1617
    %v1625 = vadd.f32 %v1615, %v1617
    %s1626 = sld [smem:[#allocation16 + $0x7]]
    %v1627 = vstv %s1626
    %v1628 = vmul.f32 %v1098, %v1627
    %v1629 = vmul.f32 %v1099, %v1627
    %v1630 = vmul.f32 %v1100, %v1627
    %v1631 = vmul.f32 %v1101, %v1627
    %v1632 = vmul.f32 %v1102, %v1627
    %v1633 = vmul.f32 %v1103, %v1627
    %v1634 = vmul.f32 %v1104, %v1627
    %v1635 = vmul.f32 %v1105, %v1627
    %v1636 = vadd.f32 %v1618, %v1628
    %v1637 = vadd.f32 %v1619, %v1629
    %v1638 = vadd.f32 %v1620, %v1630
    %v1639 = vadd.f32 %v1621, %v1631
    %v1640 = vadd.f32 %v1622, %v1632
    %v1641 = vadd.f32 %v1623, %v1633
    %v1642 = vadd.f32 %v1624, %v1634
    %v1643 = vadd.f32 %v1625, %v1635
    %s1644 = sld [smem:[#allocation16 + $0xc]]
    %v1645 = vstv %s1644
    %v1646 = vmul.f32 %v1198, %v1645
    %v1647 = vmul.f32 %v1199, %v1645
    %v1648 = vmul.f32 %v1200, %v1645
    %v1649 = vmul.f32 %v1201, %v1645
    %v1650 = vmul.f32 %v1202, %v1645
    %v1651 = vmul.f32 %v1203, %v1645
    %v1652 = vmul.f32 %v1204, %v1645
    %v1653 = vmul.f32 %v1205, %v1645
    %v1654 = vadd.f32 %v1636, %v1646
    %v1655 = vadd.f32 %v1637, %v1647
    %v1656 = vadd.f32 %v1638, %v1648
    %v1657 = vadd.f32 %v1639, %v1649
    %v1658 = vadd.f32 %v1640, %v1650
    %v1659 = vadd.f32 %v1641, %v1651
    %v1660 = vadd.f32 %v1642, %v1652
    %v1661 = vadd.f32 %v1643, %v1653
    %s1662 = sld [smem:[#allocation16 + $0x11]]
    %v1663 = vstv %s1662
    %v1664 = vmul.f32 %v1298, %v1663
    %v1665 = vmul.f32 %v1299, %v1663
    %v1666 = vmul.f32 %v1300, %v1663
    %v1667 = vmul.f32 %v1301, %v1663
    %v1668 = vmul.f32 %v1302, %v1663
    %v1669 = vmul.f32 %v1303, %v1663
    %v1670 = vmul.f32 %v1304, %v1663
    %v1671 = vmul.f32 %v1305, %v1663
    %v1672 = vadd.f32 %v1654, %v1664
    %v1673 = vadd.f32 %v1655, %v1665
    %v1674 = vadd.f32 %v1656, %v1666
    %v1675 = vadd.f32 %v1657, %v1667
    %v1676 = vadd.f32 %v1658, %v1668
    %v1677 = vadd.f32 %v1659, %v1669
    %v1678 = vadd.f32 %v1660, %v1670
    %v1679 = vadd.f32 %v1661, %v1671
    %s1680 = sld [smem:[#allocation16 + $0x16]]
    %v1681 = vstv %s1680
    %v1682 = vmul.f32 %v1398, %v1681
    %v1683 = vmul.f32 %v1399, %v1681
    %v1684 = vmul.f32 %v1400, %v1681
    %v1685 = vmul.f32 %v1401, %v1681
    %v1686 = vmul.f32 %v1402, %v1681
    %v1687 = vmul.f32 %v1403, %v1681
    %v1688 = vmul.f32 %v1404, %v1681
    %v1689 = vmul.f32 %v1405, %v1681
    %v1690 = vadd.f32 %v1672, %v1682
    %v1691 = vadd.f32 %v1673, %v1683
    %v1692 = vadd.f32 %v1674, %v1684
    %v1693 = vadd.f32 %v1675, %v1685
    %v1694 = vadd.f32 %v1676, %v1686
    %v1695 = vadd.f32 %v1677, %v1687
    %v1696 = vadd.f32 %v1678, %v1688
    %v1697 = vadd.f32 %v1679, %v1689
    %v1698 = vmax.f32 %v1690, 0.0
    %v1699 = vmax.f32 %v1691, 0.0
    %v1700 = vmax.f32 %v1692, 0.0
    %v1701 = vmax.f32 %v1693, 0.0
    %v1702 = vmax.f32 %v1694, 0.0
    %v1703 = vmax.f32 %v1695, 0.0
    %v1704 = vmax.f32 %v1696, 0.0
    %v1705 = vmax.f32 %v1697, 0.0
    %s1706 = sld [smem:[#allocation16 + $0x3]]
    %v1707 = vstv %s1706
    %v1708 = vmul.f32 %v998, %v1707
    %v1709 = vmul.f32 %v999, %v1707
    %v1710 = vmul.f32 %v1000, %v1707
    %v1711 = vmul.f32 %v1001, %v1707
    %v1712 = vmul.f32 %v1002, %v1707
    %v1713 = vmul.f32 %v1003, %v1707
    %v1714 = vmul.f32 %v1004, %v1707
    %v1715 = vmul.f32 %v1005, %v1707
    %s1716 = sld [smem:[#allocation17 + $0x3]]
    %v1717 = vstv %s1716
    %v1718 = vadd.f32 %v1708, %v1717
    %v1719 = vadd.f32 %v1709, %v1717
    %v1720 = vadd.f32 %v1710, %v1717
    %v1721 = vadd.f32 %v1711, %v1717
    %v1722 = vadd.f32 %v1712, %v1717
    %v1723 = vadd.f32 %v1713, %v1717
    %v1724 = vadd.f32 %v1714, %v1717
    %v1725 = vadd.f32 %v1715, %v1717
    %s1726 = sld [smem:[#allocation16 + $0x8]]
    %v1727 = vstv %s1726
    %v1728 = vmul.f32 %v1098, %v1727
    %v1729 = vmul.f32 %v1099, %v1727
    %v1730 = vmul.f32 %v1100, %v1727
    %v1731 = vmul.f32 %v1101, %v1727
    %v1732 = vmul.f32 %v1102, %v1727
    %v1733 = vmul.f32 %v1103, %v1727
    %v1734 = vmul.f32 %v1104, %v1727
    %v1735 = vmul.f32 %v1105, %v1727
    %v1736 = vadd.f32 %v1718, %v1728
    %v1737 = vadd.f32 %v1719, %v1729
    %v1738 = vadd.f32 %v1720, %v1730
    %v1739 = vadd.f32 %v1721, %v1731
    %v1740 = vadd.f32 %v1722, %v1732
    %v1741 = vadd.f32 %v1723, %v1733
    %v1742 = vadd.f32 %v1724, %v1734
    %v1743 = vadd.f32 %v1725, %v1735
    %s1744 = sld [smem:[#allocation16 + $0xd]]
    %v1745 = vstv %s1744
    %v1746 = vmul.f32 %v1198, %v1745
    %v1747 = vmul.f32 %v1199, %v1745
    %v1748 = vmul.f32 %v1200, %v1745
    %v1749 = vmul.f32 %v1201, %v1745
    %v1750 = vmul.f32 %v1202, %v1745
    %v1751 = vmul.f32 %v1203, %v1745
    %v1752 = vmul.f32 %v1204, %v1745
    %v1753 = vmul.f32 %v1205, %v1745
    %v1754 = vadd.f32 %v1736, %v1746
    %v1755 = vadd.f32 %v1737, %v1747
    %v1756 = vadd.f32 %v1738, %v1748
    %v1757 = vadd.f32 %v1739, %v1749
    %v1758 = vadd.f32 %v1740, %v1750
    %v1759 = vadd.f32 %v1741, %v1751
    %v1760 = vadd.f32 %v1742, %v1752
    %v1761 = vadd.f32 %v1743, %v1753
    %s1762 = sld [smem:[#allocation16 + $0x12]]
    %v1763 = vstv %s1762
    %v1764 = vmul.f32 %v1298, %v1763
    %v1765 = vmul.f32 %v1299, %v1763
    %v1766 = vmul.f32 %v1300, %v1763
    %v1767 = vmul.f32 %v1301, %v1763
    %v1768 = vmul.f32 %v1302, %v1763
    %v1769 = vmul.f32 %v1303, %v1763
    %v1770 = vmul.f32 %v1304, %v1763
    %v1771 = vmul.f32 %v1305, %v1763
    %v1772 = vadd.f32 %v1754, %v1764
    %v1773 = vadd.f32 %v1755, %v1765
    %v1774 = vadd.f32 %v1756, %v1766
    %v1775 = vadd.f32 %v1757, %v1767
    %v1776 = vadd.f32 %v1758, %v1768
    %v1777 = vadd.f32 %v1759, %v1769
    %v1778 = vadd.f32 %v1760, %v1770
    %v1779 = vadd.f32 %v1761, %v1771
    %s1780 = sld [smem:[#allocation16 + $0x17]]
    %v1781 = vstv %s1780
    %v1782 = vmul.f32 %v1398, %v1781
    %v1783 = vmul.f32 %v1399, %v1781
    %v1784 = vmul.f32 %v1400, %v1781
    %v1785 = vmul.f32 %v1401, %v1781
    %v1786 = vmul.f32 %v1402, %v1781
    %v1787 = vmul.f32 %v1403, %v1781
    %v1788 = vmul.f32 %v1404, %v1781
    %v1789 = vmul.f32 %v1405, %v1781
    %v1790 = vadd.f32 %v1772, %v1782
    %v1791 = vadd.f32 %v1773, %v1783
    %v1792 = vadd.f32 %v1774, %v1784
    %v1793 = vadd.f32 %v1775, %v1785
    %v1794 = vadd.f32 %v1776, %v1786
    %v1795 = vadd.f32 %v1777, %v1787
    %v1796 = vadd.f32 %v1778, %v1788
    %v1797 = vadd.f32 %v1779, %v1789
    %v1798 = vmax.f32 %v1790, 0.0
    %v1799 = vmax.f32 %v1791, 0.0
    %v1800 = vmax.f32 %v1792, 0.0
    %v1801 = vmax.f32 %v1793, 0.0
    %v1802 = vmax.f32 %v1794, 0.0
    %v1803 = vmax.f32 %v1795, 0.0
    %v1804 = vmax.f32 %v1796, 0.0
    %v1805 = vmax.f32 %v1797, 0.0
    %s1806 = sld [smem:[#allocation16 + $0x4]]
    %v1807 = vstv %s1806
    %v1808 = vmul.f32 %v998, %v1807
    %v1809 = vmul.f32 %v999, %v1807
    %v1810 = vmul.f32 %v1000, %v1807
    %v1811 = vmul.f32 %v1001, %v1807
    %v1812 = vmul.f32 %v1002, %v1807
    %v1813 = vmul.f32 %v1003, %v1807
    %v1814 = vmul.f32 %v1004, %v1807
    %v1815 = vmul.f32 %v1005, %v1807
    %s1816 = sld [smem:[#allocation17 + $0x4]]
    %v1817 = vstv %s1816
    %v1818 = vadd.f32 %v1808, %v1817
    %v1819 = vadd.f32 %v1809, %v1817
    %v1820 = vadd.f32 %v1810, %v1817
    %v1821 = vadd.f32 %v1811, %v1817
    %v1822 = vadd.f32 %v1812, %v1817
    %v1823 = vadd.f32 %v1813, %v1817
    %v1824 = vadd.f32 %v1814, %v1817
    %v1825 = vadd.f32 %v1815, %v1817
    %s1826 = sld [smem:[#allocation16 + $0x9]]
    %v1827 = vstv %s1826
    %v1828 = vmul.f32 %v1098, %v1827
    %v1829 = vmul.f32 %v1099, %v1827
    %v1830 = vmul.f32 %v1100, %v1827
    %v1831 = vmul.f32 %v1101, %v1827
    %v1832 = vmul.f32 %v1102, %v1827
    %v1833 = vmul.f32 %v1103, %v1827
    %v1834 = vmul.f32 %v1104, %v1827
    %v1835 = vmul.f32 %v1105, %v1827
    %v1836 = vadd.f32 %v1818, %v1828
    %v1837 = vadd.f32 %v1819, %v1829
    %v1838 = vadd.f32 %v1820, %v1830
    %v1839 = vadd.f32 %v1821, %v1831
    %v1840 = vadd.f32 %v1822, %v1832
    %v1841 = vadd.f32 %v1823, %v1833
    %v1842 = vadd.f32 %v1824, %v1834
    %v1843 = vadd.f32 %v1825, %v1835
    %s1844 = sld [smem:[#allocation16 + $0xe]]
    %v1845 = vstv %s1844
    %v1846 = vmul.f32 %v1198, %v1845
    %v1847 = vmul.f32 %v1199, %v1845
    %v1848 = vmul.f32 %v1200, %v1845
    %v1849 = vmul.f32 %v1201, %v1845
    %v1850 = vmul.f32 %v1202, %v1845
    %v1851 = vmul.f32 %v1203, %v1845
    %v1852 = vmul.f32 %v1204, %v1845
    %v1853 = vmul.f32 %v1205, %v1845
    %v1854 = vadd.f32 %v1836, %v1846
    %v1855 = vadd.f32 %v1837, %v1847
    %v1856 = vadd.f32 %v1838, %v1848
    %v1857 = vadd.f32 %v1839, %v1849
    %v1858 = vadd.f32 %v1840, %v1850
    %v1859 = vadd.f32 %v1841, %v1851
    %v1860 = vadd.f32 %v1842, %v1852
    %v1861 = vadd.f32 %v1843, %v1853
    %s1862 = sld [smem:[#allocation16 + $0x13]]
    %v1863 = vstv %s1862
    %v1864 = vmul.f32 %v1298, %v1863
    %v1865 = vmul.f32 %v1299, %v1863
    %v1866 = vmul.f32 %v1300, %v1863
    %v1867 = vmul.f32 %v1301, %v1863
    %v1868 = vmul.f32 %v1302, %v1863
    %v1869 = vmul.f32 %v1303, %v1863
    %v1870 = vmul.f32 %v1304, %v1863
    %v1871 = vmul.f32 %v1305, %v1863
    %v1872 = vadd.f32 %v1854, %v1864
    %v1873 = vadd.f32 %v1855, %v1865
    %v1874 = vadd.f32 %v1856, %v1866
    %v1875 = vadd.f32 %v1857, %v1867
    %v1876 = vadd.f32 %v1858, %v1868
    %v1877 = vadd.f32 %v1859, %v1869
    %v1878 = vadd.f32 %v1860, %v1870
    %v1879 = vadd.f32 %v1861, %v1871
    %s1880 = sld [smem:[#allocation16 + $0x18]]
    %v1881 = vstv %s1880
    %v1882 = vmul.f32 %v1398, %v1881
    %v1883 = vmul.f32 %v1399, %v1881
    %v1884 = vmul.f32 %v1400, %v1881
    %v1885 = vmul.f32 %v1401, %v1881
    %v1886 = vmul.f32 %v1402, %v1881
    %v1887 = vmul.f32 %v1403, %v1881
    %v1888 = vmul.f32 %v1404, %v1881
    %v1889 = vmul.f32 %v1405, %v1881
    %v1890 = vadd.f32 %v1872, %v1882
    %v1891 = vadd.f32 %v1873, %v1883
    %v1892 = vadd.f32 %v1874, %v1884
    %v1893 = vadd.f32 %v1875, %v1885
    %v1894 = vadd.f32 %v1876, %v1886
    %v1895 = vadd.f32 %v1877, %v1887
    %v1896 = vadd.f32 %v1878, %v1888
    %v1897 = vadd.f32 %v1879, %v1889
    %v1898 = vmax.f32 %v1890, 0.0
    %v1899 = vmax.f32 %v1891, 0.0
    %v1900 = vmax.f32 %v1892, 0.0
    %v1901 = vmax.f32 %v1893, 0.0
    %v1902 = vmax.f32 %v1894, 0.0
    %v1903 = vmax.f32 %v1895, 0.0
    %v1904 = vmax.f32 %v1896, 0.0
    %v1905 = vmax.f32 %v1897, 0.0
    %s1906 = sld [smem:[#allocation19]]
    %v1907 = vstv %s1906
    %v1908 = vmul.f32 %v1498, %v1907
    %v1909 = vmul.f32 %v1499, %v1907
    %v1910 = vmul.f32 %v1500, %v1907
    %v1911 = vmul.f32 %v1501, %v1907
    %v1912 = vmul.f32 %v1502, %v1907
    %v1913 = vmul.f32 %v1503, %v1907
    %v1914 = vmul.f32 %v1504, %v1907
    %v1915 = vmul.f32 %v1505, %v1907
    %s1916 = sld [smem:[#allocation2]]
    %v1917 = vstv %s1916
    %v1918 = vadd.f32 %v1908, %v1917
    %v1919 = vadd.f32 %v1909, %v1917
    %v1920 = vadd.f32 %v1910, %v1917
    %v1921 = vadd.f32 %v1911, %v1917
    %v1922 = vadd.f32 %v1912, %v1917
    %v1923 = vadd.f32 %v1913, %v1917
    %v1924 = vadd.f32 %v1914, %v1917
    %v1925 = vadd.f32 %v1915, %v1917
    %s1926 = sld [smem:[#allocation19 + $0x1]]
    %v1927 = vstv %s1926
    %v1928 = vmul.f32 %v1598, %v1927
    %v1929 = vmul.f32 %v1599, %v1927
    %v1930 = vmul.f32 %v1600, %v1927
    %v1931 = vmul.f32 %v1601, %v1927
    %v1932 = vmul.f32 %v1602, %v1927
    %v1933 = vmul.f32 %v1603, %v1927
    %v1934 = vmul.f32 %v1604, %v1927
    %v1935 = vmul.f32 %v1605, %v1927
    %v1936 = vadd.f32 %v1918, %v1928
    %v1937 = vadd.f32 %v1919, %v1929
    %v1938 = vadd.f32 %v1920, %v1930
    %v1939 = vadd.f32 %v1921, %v1931
    %v1940 = vadd.f32 %v1922, %v1932
    %v1941 = vadd.f32 %v1923, %v1933
    %v1942 = vadd.f32 %v1924, %v1934
    %v1943 = vadd.f32 %v1925, %v1935
    %s1944 = sld [smem:[#allocation19 + $0x2]]
    %v1945 = vstv %s1944
    %v1946 = vmul.f32 %v1698, %v1945
    %v1947 = vmul.f32 %v1699, %v1945
    %v1948 = vmul.f32 %v1700, %v1945
    %v1949 = vmul.f32 %v1701, %v1945
    %v1950 = vmul.f32 %v1702, %v1945
    %v1951 = vmul.f32 %v1703, %v1945
    %v1952 = vmul.f32 %v1704, %v1945
    %v1953 = vmul.f32 %v1705, %v1945
    %v1954 = vadd.f32 %v1936, %v1946
    %v1955 = vadd.f32 %v1937, %v1947
    %v1956 = vadd.f32 %v1938, %v1948
    %v1957 = vadd.f32 %v1939, %v1949
    %v1958 = vadd.f32 %v1940, %v1950
    %v1959 = vadd.f32 %v1941, %v1951
    %v1960 = vadd.f32 %v1942, %v1952
    %v1961 = vadd.f32 %v1943, %v1953
    %s1962 = sld [smem:[#allocation19 + $0x3]]
    %v1963 = vstv %s1962
    %v1964 = vmul.f32 %v1798, %v1963
    %v1965 = vmul.f32 %v1799, %v1963
    %v1966 = vmul.f32 %v1800, %v1963
    %v1967 = vmul.f32 %v1801, %v1963
    %v1968 = vmul.f32 %v1802, %v1963
    %v1969 = vmul.f32 %v1803, %v1963
    %v1970 = vmul.f32 %v1804, %v1963
    %v1971 = vmul.f32 %v1805, %v1963
    %v1972 = vadd.f32 %v1954, %v1964
    %v1973 = vadd.f32 %v1955, %v1965
    %v1974 = vadd.f32 %v1956, %v1966
    %v1975 = vadd.f32 %v1957, %v1967
    %v1976 = vadd.f32 %v1958, %v1968
    %v1977 = vadd.f32 %v1959, %v1969
    %v1978 = vadd.f32 %v1960, %v1970
    %v1979 = vadd.f32 %v1961, %v1971
    %s1980 = sld [smem:[#allocation19 + $0x4]]
    %v1981 = vstv %s1980
    %v1982 = vmul.f32 %v1898, %v1981
    %v1983 = vmul.f32 %v1899, %v1981
    %v1984 = vmul.f32 %v1900, %v1981
    %v1985 = vmul.f32 %v1901, %v1981
    %v1986 = vmul.f32 %v1902, %v1981
    %v1987 = vmul.f32 %v1903, %v1981
    %v1988 = vmul.f32 %v1904, %v1981
    %v1989 = vmul.f32 %v1905, %v1981
    %v1990 = vadd.f32 %v1972, %v1982
    %v1991 = vadd.f32 %v1973, %v1983
    %v1992 = vadd.f32 %v1974, %v1984
    %v1993 = vadd.f32 %v1975, %v1985
    %v1994 = vadd.f32 %v1976, %v1986
    %v1995 = vadd.f32 %v1977, %v1987
    %v1996 = vadd.f32 %v1978, %v1988
    %v1997 = vadd.f32 %v1979, %v1989
    %1998 = vst [vmem:[#allocation20] sm:$0xff] %v1990
    %1999 = vst [vmem:[#allocation20 + $0x8] sm:$0xff] %v1991
    %2000 = vst [vmem:[#allocation20 + $0x10] sm:$0xff] %v1992
    %2001 = vst [vmem:[#allocation20 + $0x18] sm:$0xff] %v1993
    %2002 = vst [vmem:[#allocation20 + $0x20] sm:$0xff] %v1994
    %2003 = vst [vmem:[#allocation20 + $0x28] sm:$0xff] %v1995
    %2004 = vst [vmem:[#allocation20 + $0x30] sm:$0xff] %v1996
    %2005 = vst [vmem:[#allocation20 + $0x38] sm:$0xff] %v1997
    // Predicated region
    $region86: #{tpu_custom_call.1} parent=1 // pred_check
      _
    $region87: #{tpu_custom_call.1} parent=1 // pred_check_branch
      %2007 = sbr.rel (0) target = $region89
    $region88: #{tpu_custom_call.1} parent=1 // pred_region
      %s2009 = ssub.s32 1024, 1024
      %2010 = vsyncadd [#allocation5], %s2009
      %s2011 = sshll.u32 [#allocation20], 4
      %s2012 = int_to_ptr.vmem [resolvable:$true] %s2011
      %2017 = dma.vmem_to_hbm [thread:$0]  %s2012, 1024, %s11, [#allocation5], 128, 128, 8
    $region89: #{tpu_custom_call.1} parent=1 // pred_fallthru
      _
    // Predicated region
    $region90: #{tpu_custom_call.1} parent=1 // pred_check
      _
    $region91: #{tpu_custom_call.1} parent=1 // pred_check_branch
      %2019 = sbr.rel (0) target = $region93
    $region92: #{tpu_custom_call.1} parent=1 // pred_region
      %2020 = dma.done [#allocation5], 1024
    $region93: #{tpu_custom_call.1} parent=1 // pred_fallthru
      _
    %2021 = vsyncpa [#allocation4], 1
    %2022 = vsyncpa [#allocation5], 1
    %2023 = vsyncpa [#allocation6], 1
    %2024 = vsyncpa [#allocation9], 1
    %2025 = vsyncpa [#allocation12], 1
    %2026 = vsyncpa [#allocation15], 1
    %2027 = vsyncpa [#allocation18], 1

</llo_original>
